<compile_context>
chip_gen: v5e
topology: v5e:2x2
jax: 0.10.0
libtpu: 0.0.40
codegen_flags: <defaults>
</compile_context>

<pallas_src>
import functools

import jax
import jax.numpy as jnp
from jax import lax
from jax.experimental import pallas as pl
from jax.experimental.pallas import tpu as pltpu

NORM_EPS = 1e-12          # torch.nn.functional.normalize eps


# ------------------------------ fused kernel ----------------------------------
def _fused_mha_kernel(x_ref, pos_ref, w_in_ref, b_in_ref, w_out_ref, b_out_ref,
                      out_ref, attn_ref, pos_sm_ref, *, num_heads, bsz):
    """One grid step = one batch tile (all heads), plus a one-time pos softmax.

    x_ref     : (Bt, L, E)   bf16 query tile (batch-major)
    pos_ref   : (bsz, D, L)  f32 positional embeddings (full, resident)
    w_in_ref  : (E, 3E) bf16 in_proj_weight.T      b_in_ref : (1, 3E) f32
    w_out_ref : (E, E)  bf16 out_proj.weight.T     b_out_ref: (1, E)  f32
    out_ref   : (Bt, L, E) f32 attention output (pre layer transpose)
    attn_ref  : (Bt, L, L) f32 head-averaged attention weights
    pos_sm_ref: (bsz, L, L) f32 VMEM scratch, persistent across grid steps
    """
    Bt, L, E = x_ref.shape
    H = num_heads
    hd = E // H
    scaling = float(hd) ** -0.5

    # --- positional cosine-similarity kernel + row softmax, once per call -----
    @pl.when(pl.program_id(0) == 0)
    def _():
        for b in range(bsz):                         # static unroll, runs once
            pe = pos_ref[b]                          # (D, L) f32
            # F.normalize(pos_embed, p=1, dim=1)
            denom = jnp.maximum(jnp.sum(jnp.abs(pe), axis=0, keepdims=True),
                                NORM_EPS)
            pen = (pe / denom).astype(jnp.bfloat16)
            # pen^T @ pen expressed via contraction dims (no materialized .T)
            sim = lax.dot_general(pen, pen,
                                  dimension_numbers=(((0,), (0,)), ((), ())),
                                  preferred_element_type=jnp.float32)  # (L, L)
            m = jnp.max(sim, axis=-1, keepdims=True)
            e = jnp.exp(sim - m)
            r = pl.reciprocal(jnp.sum(e, axis=-1, keepdims=True), approx=True)
            pos_sm_ref[b] = e * r

    # ------------------------------ attention ---------------------------------
    b0 = pl.program_id(0) * Bt                       # first batch index of tile

    # One dense (Bt*L, E) @ (E, 3E) MXU matmul gives Q, K, V for all heads.
    x2 = x_ref[...].reshape(Bt * L, E)                               # bf16
    qkv = jnp.dot(x2, w_in_ref[...], preferred_element_type=jnp.float32)
    qkv = (qkv + b_in_ref[...]).reshape(Bt, L, 3 * E)                # f32

    w_sum = jnp.zeros((Bt, L, L), jnp.float32)
    head_outs = []
    for h in range(H):                                # static unroll over heads
        q = qkv[:, :, h * hd:(h + 1) * hd] * scaling            # (Bt, L, hd)
        k = qkv[:, :, E + h * hd:E + (h + 1) * hd]
        v = qkv[:, :, 2 * E + h * hd:2 * E + (h + 1) * hd]

        s = jnp.einsum('bqd,bkd->bqk',
                       q.astype(jnp.bfloat16), k.astype(jnp.bfloat16),
                       preferred_element_type=jnp.float32)       # (Bt, L, L)

        # Faithful replication of `pos_sm.repeat(num_heads, 1, 1)`: flattened
        # attention index (b*H + h) multiplies pos_sm[(b*H + h) % bsz].
        psm = jnp.stack(
            [pos_sm_ref[((b0 + bi) * H + h) % bsz] for bi in range(Bt)],
            axis=0)                                              # (Bt, L, L)
        s = s * psm

        m = jnp.max(s, axis=-1, keepdims=True)
        e = jnp.exp(s - m)
        a = e * pl.reciprocal(jnp.sum(e, axis=-1, keepdims=True), approx=True)
        w_sum = w_sum + a
        head_outs.append(
            jnp.einsum('bqk,bkd->bqd',
                       a.astype(jnp.bfloat16), v.astype(jnp.bfloat16),
                       preferred_element_type=jnp.float32))      # (Bt, L, hd)

    concat = jnp.concatenate(head_outs, axis=-1)                 # (Bt, L, E)
    out = jnp.dot(concat.reshape(Bt * L, E).astype(jnp.bfloat16),
                  w_out_ref[...],
                  preferred_element_type=jnp.float32) + b_out_ref[...]
    out_ref[...] = out.reshape(Bt, L, E)             # full-block dense stores
    attn_ref[...] = w_sum * (1.0 / H)


# --------------------------------- wrapper ------------------------------------
def _choose_batch_tile(bsz, seq_len, target_rows=256):
    """Pick Bt so Bt*L feeds the 256-row MXU, with bsz % Bt == 0."""
    bt = min(bsz, max(1, target_rows // max(seq_len, 1)))
    while bsz % bt:
        bt -= 1
    return bt


def multihead_attention_custom_attn(query, key, value, pos_embed, params, *,
                                    num_heads, batch_tile=None):
    """query/key/value: (tgt_len, bsz, E); pos_embed: (bsz, D_pos, tgt_len).

    Returns (attn_output (tgt_len, bsz, E),
             head-averaged attn weights (bsz, tgt_len, tgt_len)).
    As in the PyTorch module's default path, `key`/`value` are ignored.
    """
    del key, value
    tgt_len, bsz, embed_dim = query.shape
    _, pos_dim, src_len = pos_embed.shape

    Bt = batch_tile or _choose_batch_tile(bsz, tgt_len)
    assert bsz % Bt == 0

    # bf16 MXU inputs (f32 accumulation in-kernel); biases / pos stay f32.
    x = jnp.transpose(query, (1, 0, 2)).astype(jnp.bfloat16)       # (bsz, L, E)
    w_in_t = jnp.transpose(params['in_proj_weight']).astype(jnp.bfloat16)
    b_in = params['in_proj_bias'][None, :].astype(jnp.float32)
    w_out_t = jnp.transpose(params['out_proj_weight']).astype(jnp.bfloat16)
    b_out = params['out_proj_bias'][None, :].astype(jnp.float32)
    pos_f32 = pos_embed.astype(jnp.float32)

    kernel = functools.partial(_fused_mha_kernel, num_heads=num_heads, bsz=bsz)

    out_nle, attn_avg = pl.pallas_call(
        kernel,
        out_shape=(jax.ShapeDtypeStruct((bsz, tgt_len, embed_dim), jnp.float32),
                   jax.ShapeDtypeStruct((bsz, tgt_len, src_len), jnp.float32)),
        grid=(bsz // Bt,),
        in_specs=[
            pl.BlockSpec((Bt, tgt_len, embed_dim), lambda b: (b, 0, 0)),
            pl.BlockSpec((bsz, pos_dim, src_len), lambda b: (0, 0, 0)),
            pl.BlockSpec((embed_dim, 3 * embed_dim), lambda b: (0, 0)),
            pl.BlockSpec((1, 3 * embed_dim), lambda b: (0, 0)),
            pl.BlockSpec((embed_dim, embed_dim), lambda b: (0, 0)),
            pl.BlockSpec((1, embed_dim), lambda b: (0, 0)),
        ],
        out_specs=(pl.BlockSpec((Bt, tgt_len, embed_dim), lambda b: (b, 0, 0)),
                   pl.BlockSpec((Bt, tgt_len, src_len), lambda b: (b, 0, 0))),
        scratch_shapes=[pltpu.VMEM((bsz, src_len, src_len), jnp.float32)],
        # "arbitrary": the pos-softmax scratch written at step 0 is read by
        # later steps, so the axis must run sequentially on one core.
        compiler_params=pltpu.CompilerParams(
            dimension_semantics=("arbitrary",)),
    )(x, pos_f32, w_in_t, b_in, w_out_t, b_out)

    attn_output = jnp.transpose(out_nle, (1, 0, 2))                 # (L, bsz, E)
    return attn_output, attn_avg


# --------------------------- pure-JAX reference --------------------------------
def _reference_forward(query, pos_embed, params, num_heads):
    P = jax.lax.Precision.HIGHEST
    tgt_len, bsz, embed_dim = query.shape
    hd = embed_dim // num_heads
    scaling = float(hd) ** -0.5

    qkv = (jnp.matmul(query, params['in_proj_weight'].T, precision=P)
           + params['in_proj_bias'])
    q, k, v = jnp.split(qkv, 3, axis=-1)

    def split_heads(t):
        return jnp.transpose(t.reshape(tgt_len, bsz * num_heads, hd), (1, 0, 2))

    q = split_heads(q) * scaling
    k = split_heads(k)
    v = split_heads(v)
    attn = jnp.einsum('bqd,bkd->bqk', q, k, precision=P)

    pen = pos_embed / jnp.maximum(
        jnp.sum(jnp.abs(pos_embed), axis=1, keepdims=True), NORM_EPS)
    sim = jnp.einsum('bdq,bdk->bqk', pen, pen, precision=P)
    psm = jax.nn.softmax(sim, axis=-1)
    attn = attn * jnp.tile(psm, (num_heads, 1, 1))      # torch .repeat(H, 1, 1)
    attn = jax.nn.softmax(attn, axis=-1)

    out = jnp.einsum('bqk,bkd->bqd', attn, v, precision=P)
    out = jnp.transpose(out, (1, 0, 2)).reshape(tgt_len, bsz, embed_dim)
    out = (jnp.matmul(out, params['out_proj_weight'].T, precision=P)
           + params['out_proj_bias'])
    attn_avg = attn.reshape(bsz, num_heads, tgt_len, tgt_len).sum(axis=1) / num_heads
    return out, attn_avg


# ---------------------------------- main --------------------------------------
if __name__ == "__main__":
    EMBED_DIM, NUM_HEADS, TGT_LEN, BSZ, POS_DIM = 32, 4, 8, 2, 16

    root = jax.random.PRNGKey(0)
    ks = jax.random.split(root, 8)
    query = jax.random.normal(ks[0], (TGT_LEN, BSZ, EMBED_DIM), jnp.float32)
    key_in = jax.random.normal(ks[1], (TGT_LEN, BSZ, EMBED_DIM), jnp.float32)
    value_in = jax.random.normal(ks[2], (TGT_LEN, BSZ, EMBED_DIM), jnp.float32)
    pos_embed = jax.random.normal(ks[3], (BSZ, POS_DIM, TGT_LEN), jnp.float32)

    params = {
        'in_proj_weight': (jax.random.normal(ks[4], (3 * EMBED_DIM, EMBED_DIM),
                                             jnp.float32)
                           / jnp.sqrt(EMBED_DIM)),
        'in_proj_bias': 0.1 * jax.random.normal(ks[5], (3 * EMBED_DIM,),
                                                jnp.float32),
        'out_proj_weight': (jax.random.normal(ks[6], (EMBED_DIM, EMBED_DIM),
                                              jnp.float32)
                            / jnp.sqrt(EMBED_DIM)),
        'out_proj_bias': 0.1 * jax.random.normal(ks[7], (EMBED_DIM,),
                                                 jnp.float32),
    }

    fwd = jax.jit(functools.partial(multihead_attention_custom_attn,
                                    num_heads=NUM_HEADS))
    out, attn_avg = fwd(query, key_in, value_in, pos_embed, params)
    out = jax.block_until_ready(out)
    attn_avg = jax.block_until_ready(attn_avg)
    assert out.shape == (TGT_LEN, BSZ, EMBED_DIM), out.shape
    assert attn_avg.shape == (BSZ, TGT_LEN, TGT_LEN), attn_avg.shape

    ref_out, ref_attn = _reference_forward(query, pos_embed, params, NUM_HEADS)
    err_out = float(jnp.max(jnp.abs(out - ref_out)))
    err_attn = float(jnp.max(jnp.abs(attn_avg - ref_attn)))
    # Tolerance budget: bf16-input MXU matmuls (~0.4% per operand) chained
    # through four matmul stages plus approx-reciprocal softmax denominators,
    # compared against a Precision.HIGHEST f32 reference with |out| ~ O(3).
    assert err_out < 1e-1, f"attn_output mismatch: {err_out}"
    assert err_attn < 2.5e-2, f"attn_weights mismatch: {err_attn}"

    print("KERNEL_OK")
</pallas_src>

<mosaic_0001>
module attributes {stable_mosaic.version = 11 : i64} {
  func.func @_fused_mha_kernel(%arg0: i32, %arg1: memref<2x8x32xbf16, #tpu.memory_space<vmem>>, %arg2: memref<2x16x8xf32, #tpu.memory_space<vmem>>, %arg3: memref<32x96xbf16, #tpu.memory_space<vmem>>, %arg4: memref<1x96xf32, #tpu.memory_space<vmem>>, %arg5: memref<32x32xbf16, #tpu.memory_space<vmem>>, %arg6: memref<1x32xf32, #tpu.memory_space<vmem>>, %arg7: memref<2x8x32xf32, #tpu.memory_space<vmem>>, %arg8: memref<2x8x8xf32, #tpu.memory_space<vmem>>, %arg9: memref<2x8x8xf32, #tpu.memory_space<vmem>>) attributes {dimension_semantics = [#tpu.dimension_semantics<arbitrary>], iteration_bounds = array<i64: 1>, scalar_prefetch = 0 : i64, scratch_operands = 1 : i64, tpu.core_type = #tpu.core_type<tc>, window_params = [{transform_indices = @transform_0, window_bounds = array<i64: 2, 8, 32>}, {pipeline_mode = #tpu.pipeline_mode<synchronous>, transform_indices = @transform_1, window_bounds = array<i64: 2, 16, 8>}, {pipeline_mode = #tpu.pipeline_mode<synchronous>, transform_indices = @transform_2, window_bounds = array<i64: 32, 96>}, {pipeline_mode = #tpu.pipeline_mode<synchronous>, transform_indices = @transform_3, window_bounds = array<i64: 1, 96>}, {pipeline_mode = #tpu.pipeline_mode<synchronous>, transform_indices = @transform_4, window_bounds = array<i64: 32, 32>}, {pipeline_mode = #tpu.pipeline_mode<synchronous>, transform_indices = @transform_5, window_bounds = array<i64: 1, 32>}, {transform_indices = @transform_6, window_bounds = array<i64: 2, 8, 32>}, {transform_indices = @transform_7, window_bounds = array<i64: 2, 8, 8>}]} {
    %c0_i32 = arith.constant 0 : i32
    %0 = arith.cmpi eq, %arg0, %c0_i32 : i32
    %1 = arith.extui %0 : i1 to i32
    %c0_i32_0 = arith.constant 0 : i32
    %2 = arith.cmpi ne, %1, %c0_i32_0 : i32
    scf.if %2 {
      %c0_125 = arith.constant 0 : index
      %c0_126 = arith.constant 0 : index
      %c0_127 = arith.constant 0 : index
      %258 = vector.load %arg2[%c0_125, %c0_126, %c0_127] : memref<2x16x8xf32, #tpu.memory_space<vmem>>, vector<1x16x8xf32>
      %259 = vector.shape_cast %258 : vector<1x16x8xf32> to vector<16x8xf32>
      %260 = math.absf %259 : vector<16x8xf32>
      %cst_128 = arith.constant dense<0.000000e+00> : vector<8xf32>
      %261 = vector.multi_reduction <add>, %260, %cst_128 [0] : vector<16x8xf32> to vector<8xf32>
      %262 = vector.shape_cast %261 : vector<8xf32> to vector<1x8xf32>
      %cst_129 = arith.constant 9.99999996E-13 : f32
      %263 = vector.broadcast %cst_129 : f32 to vector<1x8xf32>
      %264 = arith.maximumf %262, %263 : vector<1x8xf32>
      %265 = vector.broadcast %264 : vector<1x8xf32> to vector<16x8xf32>
      %266 = arith.divf %259, %265 : vector<16x8xf32>
      %267 = arith.truncf %266 : vector<16x8xf32> to vector<16x8xbf16>
      %cst_130 = arith.constant dense<0.000000e+00> : vector<8x8xf32>
      %268 = tpu.matmul %267, %267, %cst_130 {dimension_numbers = #tpu.dot_dimension_numbers<[0], [0], [1], [1], [0, 1, 1, 1], [], []>} : vector<16x8xbf16>, vector<16x8xbf16>, vector<8x8xf32> -> vector<8x8xf32>
      %cst_131 = arith.constant dense<0xFF800000> : vector<8xf32>
      %269 = vector.multi_reduction <maximumf>, %268, %cst_131 [1] : vector<8x8xf32> to vector<8xf32>
      %270 = vector.shape_cast %269 : vector<8xf32> to vector<8x1xf32>
      %271 = vector.broadcast %270 : vector<8x1xf32> to vector<8x8xf32>
      %272 = arith.subf %268, %271 : vector<8x8xf32>
      %273 = math.exp %272 : vector<8x8xf32>
      %cst_132 = arith.constant dense<0.000000e+00> : vector<8xf32>
      %274 = vector.multi_reduction <add>, %273, %cst_132 [1] : vector<8x8xf32> to vector<8xf32>
      %275 = vector.shape_cast %274 : vector<8xf32> to vector<8x1xf32>
      %276 = tpu.reciprocal %275 {approx = true} : vector<8x1xf32> -> vector<8x1xf32>
      %277 = vector.broadcast %276 : vector<8x1xf32> to vector<8x8xf32>
      %278 = arith.mulf %273, %277 : vector<8x8xf32>
      %c0_133 = arith.constant 0 : index
      %c0_134 = arith.constant 0 : index
      %c0_135 = arith.constant 0 : index
      %279 = vector.load %arg9[%c0_133, %c0_134, %c0_135] : memref<2x8x8xf32, #tpu.memory_space<vmem>>, vector<1x8x8xf32>
      %280 = vector.shape_cast %279 : vector<1x8x8xf32> to vector<8x8xf32>
      %281 = vector.shape_cast %278 : vector<8x8xf32> to vector<1x8x8xf32>
      tpu.vector_store %arg9[%c0_133, %c0_134, %c0_135], %281 {strides = array<i32>} : memref<2x8x8xf32, #tpu.memory_space<vmem>>, vector<1x8x8xf32>,
      %c1 = arith.constant 1 : index
      %c0_136 = arith.constant 0 : index
      %c0_137 = arith.constant 0 : index
      %282 = vector.load %arg2[%c1, %c0_136, %c0_137] : memref<2x16x8xf32, #tpu.memory_space<vmem>>, vector<1x16x8xf32>
      %283 = vector.shape_cast %282 : vector<1x16x8xf32> to vector<16x8xf32>
      %284 = math.absf %283 : vector<16x8xf32>
      %cst_138 = arith.constant dense<0.000000e+00> : vector<8xf32>
      %285 = vector.multi_reduction <add>, %284, %cst_138 [0] : vector<16x8xf32> to vector<8xf32>
      %286 = vector.shape_cast %285 : vector<8xf32> to vector<1x8xf32>
      %cst_139 = arith.constant 9.99999996E-13 : f32
      %287 = vector.broadcast %cst_139 : f32 to vector<1x8xf32>
      %288 = arith.maximumf %286, %287 : vector<1x8xf32>
      %289 = vector.broadcast %288 : vector<1x8xf32> to vector<16x8xf32>
      %290 = arith.divf %283, %289 : vector<16x8xf32>
      %291 = arith.truncf %290 : vector<16x8xf32> to vector<16x8xbf16>
      %cst_140 = arith.constant dense<0.000000e+00> : vector<8x8xf32>
      %292 = tpu.matmul %291, %291, %cst_140 {dimension_numbers = #tpu.dot_dimension_numbers<[0], [0], [1], [1], [0, 1, 1, 1], [], []>} : vector<16x8xbf16>, vector<16x8xbf16>, vector<8x8xf32> -> vector<8x8xf32>
      %cst_141 = arith.constant dense<0xFF800000> : vector<8xf32>
      %293 = vector.multi_reduction <maximumf>, %292, %cst_141 [1] : vector<8x8xf32> to vector<8xf32>
      %294 = vector.shape_cast %293 : vector<8xf32> to vector<8x1xf32>
      %295 = vector.broadcast %294 : vector<8x1xf32> to vector<8x8xf32>
      %296 = arith.subf %292, %295 : vector<8x8xf32>
      %297 = math.exp %296 : vector<8x8xf32>
      %cst_142 = arith.constant dense<0.000000e+00> : vector<8xf32>
      %298 = vector.multi_reduction <add>, %297, %cst_142 [1] : vector<8x8xf32> to vector<8xf32>
      %299 = vector.shape_cast %298 : vector<8xf32> to vector<8x1xf32>
      %300 = tpu.reciprocal %299 {approx = true} : vector<8x1xf32> -> vector<8x1xf32>
      %301 = vector.broadcast %300 : vector<8x1xf32> to vector<8x8xf32>
      %302 = arith.mulf %297, %301 : vector<8x8xf32>
      %c1_143 = arith.constant 1 : index
      %c0_144 = arith.constant 0 : index
      %c0_145 = arith.constant 0 : index
      %303 = vector.load %arg9[%c1_143, %c0_144, %c0_145] : memref<2x8x8xf32, #tpu.memory_space<vmem>>, vector<1x8x8xf32>
      %304 = vector.shape_cast %303 : vector<1x8x8xf32> to vector<8x8xf32>
      %305 = vector.shape_cast %302 : vector<8x8xf32> to vector<1x8x8xf32>
      tpu.vector_store %arg9[%c1_143, %c0_144, %c0_145], %305 {strides = array<i32>} : memref<2x8x8xf32, #tpu.memory_space<vmem>>, vector<1x8x8xf32>,
    } else {
    }
    %c2_i32 = arith.constant 2 : i32
    %3 = arith.muli %arg0, %c2_i32 : i32
    %c0 = arith.constant 0 : index
    %c0_1 = arith.constant 0 : index
    %c0_2 = arith.constant 0 : index
    %4 = vector.load %arg1[%c0, %c0_1, %c0_2] : memref<2x8x32xbf16, #tpu.memory_space<vmem>>, vector<2x8x32xbf16>
    %5 = vector.shape_cast %4 : vector<2x8x32xbf16> to vector<16x32xbf16>
    %c0_3 = arith.constant 0 : index
    %c0_4 = arith.constant 0 : index
    %6 = vector.load %arg3[%c0_3, %c0_4] : memref<32x96xbf16, #tpu.memory_space<vmem>>, vector<32x96xbf16>
    %cst = arith.constant dense<0.000000e+00> : vector<16x96xf32>
    %7 = tpu.matmul %5, %6, %cst {dimension_numbers = #tpu.dot_dimension_numbers<[1], [0], [0], [1], [0, 0, 1, 1], [], []>} : vector<16x32xbf16>, vector<32x96xbf16>, vector<16x96xf32> -> vector<16x96xf32>
    %c0_5 = arith.constant 0 : index
    %c0_6 = arith.constant 0 : index
    %8 = vector.load %arg4[%c0_5, %c0_6] : memref<1x96xf32, #tpu.memory_space<vmem>>, vector<1x96xf32>
    %9 = vector.broadcast %8 : vector<1x96xf32> to vector<16x96xf32>
    %10 = arith.addf %7, %9 : vector<16x96xf32>
    %11 = vector.shape_cast %10 : vector<16x96xf32> to vector<2x8x96xf32>
    %cst_7 = arith.constant 0.000000e+00 : f32
    %12 = vector.broadcast %cst_7 : f32 to vector<2x8x8xf32>
    %13 = vector.extract_strided_slice %11 {offsets = [0, 0, 0], sizes = [2, 8, 8], strides = [1, 1, 1]} : vector<2x8x96xf32> to vector<2x8x8xf32>
    %cst_8 = arith.constant 0.353553385 : f32
    %14 = vector.broadcast %cst_8 : f32 to vector<2x8x8xf32>
    %15 = arith.mulf %13, %14 : vector<2x8x8xf32>
    %16 = vector.extract_strided_slice %11 {offsets = [0, 0, 32], sizes = [2, 8, 8], strides = [1, 1, 1]} : vector<2x8x96xf32> to vector<2x8x8xf32>
    %17 = vector.extract_strided_slice %11 {offsets = [0, 0, 64], sizes = [2, 8, 8], strides = [1, 1, 1]} : vector<2x8x96xf32> to vector<2x8x8xf32>
    %18 = arith.truncf %15 : vector<2x8x8xf32> to vector<2x8x8xbf16>
    %19 = arith.truncf %16 : vector<2x8x8xf32> to vector<2x8x8xbf16>
    "tpu.trace_start"() <{level = 10 : i32, message = "bqd,bkd->bqk"}> : () -> ()
    %cst_9 = arith.constant dense<0.000000e+00> : vector<2x8x8xf32>
    %20 = tpu.matmul %18, %19, %cst_9 {dimension_numbers = #tpu.dot_dimension_numbers<[2], [2], [1], [1], [0, 0, 0, 1, 1, 1], [0], [0]>} : vector<2x8x8xbf16>, vector<2x8x8xbf16>, vector<2x8x8xf32> -> vector<2x8x8xf32>
    "tpu.trace_stop"() : () -> ()
    %c0_i32_10 = arith.constant 0 : i32
    %21 = arith.addi %3, %c0_i32_10 : i32
    %c4_i32 = arith.constant 4 : i32
    %22 = arith.muli %21, %c4_i32 : i32
    %c0_i32_11 = arith.constant 0 : i32
    %23 = arith.addi %22, %c0_i32_11 : i32
    %c2_i32_12 = arith.constant 2 : i32
    %c0_i32_13 = arith.constant 0 : i32
    %24 = arith.cmpi eq, %c2_i32_12, %c0_i32_13 : i32
    %c1_i32 = arith.constant 1 : i32
    %25 = arith.select %24, %c1_i32, %c2_i32_12 : i32
    %26 = arith.remsi %23, %25 : i32
    %c0_i32_14 = arith.constant 0 : i32
    %27 = arith.cmpi ne, %26, %c0_i32_14 : i32
    %c0_i32_15 = arith.constant 0 : i32
    %28 = arith.cmpi slt, %26, %c0_i32_15 : i32
    %c0_i32_16 = arith.constant 0 : i32
    %29 = arith.cmpi slt, %25, %c0_i32_16 : i32
    %30 = arith.xori %28, %29 : i1
    %31 = arith.andi %30, %27 : i1
    %32 = arith.addi %26, %25 : i32
    %33 = arith.select %31, %32, %26 : i32
    %34 = arith.index_cast %33 : i32 to index
    %c0_17 = arith.constant 0 : index
    %c0_18 = arith.constant 0 : index
    %35 = vector.load %arg9[%34, %c0_17, %c0_18] : memref<2x8x8xf32, #tpu.memory_space<vmem>>, vector<1x8x8xf32>
    %36 = vector.shape_cast %35 : vector<1x8x8xf32> to vector<8x8xf32>
    %c1_i32_19 = arith.constant 1 : i32
    %37 = arith.addi %3, %c1_i32_19 : i32
    %c4_i32_20 = arith.constant 4 : i32
    %38 = arith.muli %37, %c4_i32_20 : i32
    %c0_i32_21 = arith.constant 0 : i32
    %39 = arith.addi %38, %c0_i32_21 : i32
    %c2_i32_22 = arith.constant 2 : i32
    %c0_i32_23 = arith.constant 0 : i32
    %40 = arith.cmpi eq, %c2_i32_22, %c0_i32_23 : i32
    %c1_i32_24 = arith.constant 1 : i32
    %41 = arith.select %40, %c1_i32_24, %c2_i32_22 : i32
    %42 = arith.remsi %39, %41 : i32
    %c0_i32_25 = arith.constant 0 : i32
    %43 = arith.cmpi ne, %42, %c0_i32_25 : i32
    %c0_i32_26 = arith.constant 0 : i32
    %44 = arith.cmpi slt, %42, %c0_i32_26 : i32
    %c0_i32_27 = arith.constant 0 : i32
    %45 = arith.cmpi slt, %41, %c0_i32_27 : i32
    %46 = arith.xori %44, %45 : i1
    %47 = arith.andi %46, %43 : i1
    %48 = arith.addi %42, %41 : i32
    %49 = arith.select %47, %48, %42 : i32
    %50 = arith.index_cast %49 : i32 to index
    %c0_28 = arith.constant 0 : index
    %c0_29 = arith.constant 0 : index
    %51 = vector.load %arg9[%50, %c0_28, %c0_29] : memref<2x8x8xf32, #tpu.memory_space<vmem>>, vector<1x8x8xf32>
    %52 = vector.shape_cast %51 : vector<1x8x8xf32> to vector<8x8xf32>
    %53 = vector.shape_cast %36 : vector<8x8xf32> to vector<1x8x8xf32>
    %54 = vector.shape_cast %52 : vector<8x8xf32> to vector<1x8x8xf32>
    %55 = tpu.concatenate %53, %54 in 0 : vector<1x8x8xf32>, vector<1x8x8xf32> -> vector<2x8x8xf32>
    %56 = arith.mulf %20, %55 : vector<2x8x8xf32>
    %cst_30 = arith.constant dense<0xFF800000> : vector<2x8xf32>
    %57 = vector.multi_reduction <maximumf>, %56, %cst_30 [2] : vector<2x8x8xf32> to vector<2x8xf32>
    %58 = vector.shape_cast %57 : vector<2x8xf32> to vector<2x8x1xf32>
    %59 = vector.broadcast %58 : vector<2x8x1xf32> to vector<2x8x8xf32>
    %60 = arith.subf %56, %59 : vector<2x8x8xf32>
    %61 = math.exp %60 : vector<2x8x8xf32>
    %cst_31 = arith.constant dense<0.000000e+00> : vector<2x8xf32>
    %62 = vector.multi_reduction <add>, %61, %cst_31 [2] : vector<2x8x8xf32> to vector<2x8xf32>
    %63 = vector.shape_cast %62 : vector<2x8xf32> to vector<2x8x1xf32>
    %64 = tpu.reciprocal %63 {approx = true} : vector<2x8x1xf32> -> vector<2x8x1xf32>
    %65 = vector.broadcast %64 : vector<2x8x1xf32> to vector<2x8x8xf32>
    %66 = arith.mulf %61, %65 : vector<2x8x8xf32>
    %67 = arith.addf %12, %66 : vector<2x8x8xf32>
    %68 = arith.truncf %66 : vector<2x8x8xf32> to vector<2x8x8xbf16>
    %69 = arith.truncf %17 : vector<2x8x8xf32> to vector<2x8x8xbf16>
    "tpu.trace_start"() <{level = 10 : i32, message = "bqk,bkd->bqd"}> : () -> ()
    %cst_32 = arith.constant dense<0.000000e+00> : vector<2x8x8xf32>
    %70 = tpu.matmul %68, %69, %cst_32 {dimension_numbers = #tpu.dot_dimension_numbers<[2], [1], [1], [2], [0, 0, 0, 1, 1, 2], [0], [0]>} : vector<2x8x8xbf16>, vector<2x8x8xbf16>, vector<2x8x8xf32> -> vector<2x8x8xf32>
    "tpu.trace_stop"() : () -> ()
    %71 = vector.extract_strided_slice %11 {offsets = [0, 0, 8], sizes = [2, 8, 8], strides = [1, 1, 1]} : vector<2x8x96xf32> to vector<2x8x8xf32>
    %cst_33 = arith.constant 0.353553385 : f32
    %72 = vector.broadcast %cst_33 : f32 to vector<2x8x8xf32>
    %73 = arith.mulf %71, %72 : vector<2x8x8xf32>
    %74 = vector.extract_strided_slice %11 {offsets = [0, 0, 40], sizes = [2, 8, 8], strides = [1, 1, 1]} : vector<2x8x96xf32> to vector<2x8x8xf32>
    %75 = vector.extract_strided_slice %11 {offsets = [0, 0, 72], sizes = [2, 8, 8], strides = [1, 1, 1]} : vector<2x8x96xf32> to vector<2x8x8xf32>
    %76 = arith.truncf %73 : vector<2x8x8xf32> to vector<2x8x8xbf16>
    %77 = arith.truncf %74 : vector<2x8x8xf32> to vector<2x8x8xbf16>
    "tpu.trace_start"() <{level = 10 : i32, message = "bqd,bkd->bqk"}> : () -> ()
    %cst_34 = arith.constant dense<0.000000e+00> : vector<2x8x8xf32>
    %78 = tpu.matmul %76, %77, %cst_34 {dimension_numbers = #tpu.dot_dimension_numbers<[2], [2], [1], [1], [0, 0, 0, 1, 1, 1], [0], [0]>} : vector<2x8x8xbf16>, vector<2x8x8xbf16>, vector<2x8x8xf32> -> vector<2x8x8xf32>
    "tpu.trace_stop"() : () -> ()
    %c0_i32_35 = arith.constant 0 : i32
    %79 = arith.addi %3, %c0_i32_35 : i32
    %c4_i32_36 = arith.constant 4 : i32
    %80 = arith.muli %79, %c4_i32_36 : i32
    %c1_i32_37 = arith.constant 1 : i32
    %81 = arith.addi %80, %c1_i32_37 : i32
    %c2_i32_38 = arith.constant 2 : i32
    %c0_i32_39 = arith.constant 0 : i32
    %82 = arith.cmpi eq, %c2_i32_38, %c0_i32_39 : i32
    %c1_i32_40 = arith.constant 1 : i32
    %83 = arith.select %82, %c1_i32_40, %c2_i32_38 : i32
    %84 = arith.remsi %81, %83 : i32
    %c0_i32_41 = arith.constant 0 : i32
    %85 = arith.cmpi ne, %84, %c0_i32_41 : i32
    %c0_i32_42 = arith.constant 0 : i32
    %86 = arith.cmpi slt, %84, %c0_i32_42 : i32
    %c0_i32_43 = arith.constant 0 : i32
    %87 = arith.cmpi slt, %83, %c0_i32_43 : i32
    %88 = arith.xori %86, %87 : i1
    %89 = arith.andi %88, %85 : i1
    %90 = arith.addi %84, %83 : i32
    %91 = arith.select %89, %90, %84 : i32
    %92 = arith.index_cast %91 : i32 to index
    %c0_44 = arith.constant 0 : index
    %c0_45 = arith.constant 0 : index
    %93 = vector.load %arg9[%92, %c0_44, %c0_45] : memref<2x8x8xf32, #tpu.memory_space<vmem>>, vector<1x8x8xf32>
    %94 = vector.shape_cast %93 : vector<1x8x8xf32> to vector<8x8xf32>
    %c1_i32_46 = arith.constant 1 : i32
    %95 = arith.addi %3, %c1_i32_46 : i32
    %c4_i32_47 = arith.constant 4 : i32
    %96 = arith.muli %95, %c4_i32_47 : i32
    %c1_i32_48 = arith.constant 1 : i32
    %97 = arith.addi %96, %c1_i32_48 : i32
    %c2_i32_49 = arith.constant 2 : i32
    %c0_i32_50 = arith.constant 0 : i32
    %98 = arith.cmpi eq, %c2_i32_49, %c0_i32_50 : i32
    %c1_i32_51 = arith.constant 1 : i32
    %99 = arith.select %98, %c1_i32_51, %c2_i32_49 : i32
    %100 = arith.remsi %97, %99 : i32
    %c0_i32_52 = arith.constant 0 : i32
    %101 = arith.cmpi ne, %100, %c0_i32_52 : i32
    %c0_i32_53 = arith.constant 0 : i32
    %102 = arith.cmpi slt, %100, %c0_i32_53 : i32
    %c0_i32_54 = arith.constant 0 : i32
    %103 = arith.cmpi slt, %99, %c0_i32_54 : i32
    %104 = arith.xori %102, %103 : i1
    %105 = arith.andi %104, %101 : i1
    %106 = arith.addi %100, %99 : i32
    %107 = arith.select %105, %106, %100 : i32
    %108 = arith.index_cast %107 : i32 to index
    %c0_55 = arith.constant 0 : index
    %c0_56 = arith.constant 0 : index
    %109 = vector.load %arg9[%108, %c0_55, %c0_56] : memref<2x8x8xf32, #tpu.memory_space<vmem>>, vector<1x8x8xf32>
    %110 = vector.shape_cast %109 : vector<1x8x8xf32> to vector<8x8xf32>
    %111 = vector.shape_cast %94 : vector<8x8xf32> to vector<1x8x8xf32>
    %112 = vector.shape_cast %110 : vector<8x8xf32> to vector<1x8x8xf32>
    %113 = tpu.concatenate %111, %112 in 0 : vector<1x8x8xf32>, vector<1x8x8xf32> -> vector<2x8x8xf32>
    %114 = arith.mulf %78, %113 : vector<2x8x8xf32>
    %cst_57 = arith.constant dense<0xFF800000> : vector<2x8xf32>
    %115 = vector.multi_reduction <maximumf>, %114, %cst_57 [2] : vector<2x8x8xf32> to vector<2x8xf32>
    %116 = vector.shape_cast %115 : vector<2x8xf32> to vector<2x8x1xf32>
    %117 = vector.broadcast %116 : vector<2x8x1xf32> to vector<2x8x8xf32>
    %118 = arith.subf %114, %117 : vector<2x8x8xf32>
    %119 = math.exp %118 : vector<2x8x8xf32>
    %cst_58 = arith.constant dense<0.000000e+00> : vector<2x8xf32>
    %120 = vector.multi_reduction <add>, %119, %cst_58 [2] : vector<2x8x8xf32> to vector<2x8xf32>
    %121 = vector.shape_cast %120 : vector<2x8xf32> to vector<2x8x1xf32>
    %122 = tpu.reciprocal %121 {approx = true} : vector<2x8x1xf32> -> vector<2x8x1xf32>
    %123 = vector.broadcast %122 : vector<2x8x1xf32> to vector<2x8x8xf32>
    %124 = arith.mulf %119, %123 : vector<2x8x8xf32>
    %125 = arith.addf %67, %124 : vector<2x8x8xf32>
    %126 = arith.truncf %124 : vector<2x8x8xf32> to vector<2x8x8xbf16>
    %127 = arith.truncf %75 : vector<2x8x8xf32> to vector<2x8x8xbf16>
    "tpu.trace_start"() <{level = 10 : i32, message = "bqk,bkd->bqd"}> : () -> ()
    %cst_59 = arith.constant dense<0.000000e+00> : vector<2x8x8xf32>
    %128 = tpu.matmul %126, %127, %cst_59 {dimension_numbers = #tpu.dot_dimension_numbers<[2], [1], [1], [2], [0, 0, 0, 1, 1, 2], [0], [0]>} : vector<2x8x8xbf16>, vector<2x8x8xbf16>, vector<2x8x8xf32> -> vector<2x8x8xf32>
    "tpu.trace_stop"() : () -> ()
    %129 = vector.extract_strided_slice %11 {offsets = [0, 0, 16], sizes = [2, 8, 8], strides = [1, 1, 1]} : vector<2x8x96xf32> to vector<2x8x8xf32>
    %cst_60 = arith.constant 0.353553385 : f32
    %130 = vector.broadcast %cst_60 : f32 to vector<2x8x8xf32>
    %131 = arith.mulf %129, %130 : vector<2x8x8xf32>
    %132 = vector.extract_strided_slice %11 {offsets = [0, 0, 48], sizes = [2, 8, 8], strides = [1, 1, 1]} : vector<2x8x96xf32> to vector<2x8x8xf32>
    %133 = vector.extract_strided_slice %11 {offsets = [0, 0, 80], sizes = [2, 8, 8], strides = [1, 1, 1]} : vector<2x8x96xf32> to vector<2x8x8xf32>
    %134 = arith.truncf %131 : vector<2x8x8xf32> to vector<2x8x8xbf16>
    %135 = arith.truncf %132 : vector<2x8x8xf32> to vector<2x8x8xbf16>
    "tpu.trace_start"() <{level = 10 : i32, message = "bqd,bkd->bqk"}> : () -> ()
    %cst_61 = arith.constant dense<0.000000e+00> : vector<2x8x8xf32>
    %136 = tpu.matmul %134, %135, %cst_61 {dimension_numbers = #tpu.dot_dimension_numbers<[2], [2], [1], [1], [0, 0, 0, 1, 1, 1], [0], [0]>} : vector<2x8x8xbf16>, vector<2x8x8xbf16>, vector<2x8x8xf32> -> vector<2x8x8xf32>
    "tpu.trace_stop"() : () -> ()
    %c0_i32_62 = arith.constant 0 : i32
    %137 = arith.addi %3, %c0_i32_62 : i32
    %c4_i32_63 = arith.constant 4 : i32
    %138 = arith.muli %137, %c4_i32_63 : i32
    %c2_i32_64 = arith.constant 2 : i32
    %139 = arith.addi %138, %c2_i32_64 : i32
    %c2_i32_65 = arith.constant 2 : i32
    %c0_i32_66 = arith.constant 0 : i32
    %140 = arith.cmpi eq, %c2_i32_65, %c0_i32_66 : i32
    %c1_i32_67 = arith.constant 1 : i32
    %141 = arith.select %140, %c1_i32_67, %c2_i32_65 : i32
    %142 = arith.remsi %139, %141 : i32
    %c0_i32_68 = arith.constant 0 : i32
    %143 = arith.cmpi ne, %142, %c0_i32_68 : i32
    %c0_i32_69 = arith.constant 0 : i32
    %144 = arith.cmpi slt, %142, %c0_i32_69 : i32
    %c0_i32_70 = arith.constant 0 : i32
    %145 = arith.cmpi slt, %141, %c0_i32_70 : i32
    %146 = arith.xori %144, %145 : i1
    %147 = arith.andi %146, %143 : i1
    %148 = arith.addi %142, %141 : i32
    %149 = arith.select %147, %148, %142 : i32
    %150 = arith.index_cast %149 : i32 to index
    %c0_71 = arith.constant 0 : index
    %c0_72 = arith.constant 0 : index
    %151 = vector.load %arg9[%150, %c0_71, %c0_72] : memref<2x8x8xf32, #tpu.memory_space<vmem>>, vector<1x8x8xf32>
    %152 = vector.shape_cast %151 : vector<1x8x8xf32> to vector<8x8xf32>
    %c1_i32_73 = arith.constant 1 : i32
    %153 = arith.addi %3, %c1_i32_73 : i32
    %c4_i32_74 = arith.constant 4 : i32
    %154 = arith.muli %153, %c4_i32_74 : i32
    %c2_i32_75 = arith.constant 2 : i32
    %155 = arith.addi %154, %c2_i32_75 : i32
    %c2_i32_76 = arith.constant 2 : i32
    %c0_i32_77 = arith.constant 0 : i32
    %156 = arith.cmpi eq, %c2_i32_76, %c0_i32_77 : i32
    %c1_i32_78 = arith.constant 1 : i32
    %157 = arith.select %156, %c1_i32_78, %c2_i32_76 : i32
    %158 = arith.remsi %155, %157 : i32
    %c0_i32_79 = arith.constant 0 : i32
    %159 = arith.cmpi ne, %158, %c0_i32_79 : i32
    %c0_i32_80 = arith.constant 0 : i32
    %160 = arith.cmpi slt, %158, %c0_i32_80 : i32
    %c0_i32_81 = arith.constant 0 : i32
    %161 = arith.cmpi slt, %157, %c0_i32_81 : i32
    %162 = arith.xori %160, %161 : i1
    %163 = arith.andi %162, %159 : i1
    %164 = arith.addi %158, %157 : i32
    %165 = arith.select %163, %164, %158 : i32
    %166 = arith.index_cast %165 : i32 to index
    %c0_82 = arith.constant 0 : index
    %c0_83 = arith.constant 0 : index
    %167 = vector.load %arg9[%166, %c0_82, %c0_83] : memref<2x8x8xf32, #tpu.memory_space<vmem>>, vector<1x8x8xf32>
    %168 = vector.shape_cast %167 : vector<1x8x8xf32> to vector<8x8xf32>
    %169 = vector.shape_cast %152 : vector<8x8xf32> to vector<1x8x8xf32>
    %170 = vector.shape_cast %168 : vector<8x8xf32> to vector<1x8x8xf32>
    %171 = tpu.concatenate %169, %170 in 0 : vector<1x8x8xf32>, vector<1x8x8xf32> -> vector<2x8x8xf32>
    %172 = arith.mulf %136, %171 : vector<2x8x8xf32>
    %cst_84 = arith.constant dense<0xFF800000> : vector<2x8xf32>
    %173 = vector.multi_reduction <maximumf>, %172, %cst_84 [2] : vector<2x8x8xf32> to vector<2x8xf32>
    %174 = vector.shape_cast %173 : vector<2x8xf32> to vector<2x8x1xf32>
    %175 = vector.broadcast %174 : vector<2x8x1xf32> to vector<2x8x8xf32>
    %176 = arith.subf %172, %175 : vector<2x8x8xf32>
    %177 = math.exp %176 : vector<2x8x8xf32>
    %cst_85 = arith.constant dense<0.000000e+00> : vector<2x8xf32>
    %178 = vector.multi_reduction <add>, %177, %cst_85 [2] : vector<2x8x8xf32> to vector<2x8xf32>
    %179 = vector.shape_cast %178 : vector<2x8xf32> to vector<2x8x1xf32>
    %180 = tpu.reciprocal %179 {approx = true} : vector<2x8x1xf32> -> vector<2x8x1xf32>
    %181 = vector.broadcast %180 : vector<2x8x1xf32> to vector<2x8x8xf32>
    %182 = arith.mulf %177, %181 : vector<2x8x8xf32>
    %183 = arith.addf %125, %182 : vector<2x8x8xf32>
    %184 = arith.truncf %182 : vector<2x8x8xf32> to vector<2x8x8xbf16>
    %185 = arith.truncf %133 : vector<2x8x8xf32> to vector<2x8x8xbf16>
    "tpu.trace_start"() <{level = 10 : i32, message = "bqk,bkd->bqd"}> : () -> ()
    %cst_86 = arith.constant dense<0.000000e+00> : vector<2x8x8xf32>
    %186 = tpu.matmul %184, %185, %cst_86 {dimension_numbers = #tpu.dot_dimension_numbers<[2], [1], [1], [2], [0, 0, 0, 1, 1, 2], [0], [0]>} : vector<2x8x8xbf16>, vector<2x8x8xbf16>, vector<2x8x8xf32> -> vector<2x8x8xf32>
    "tpu.trace_stop"() : () -> ()
    %187 = vector.extract_strided_slice %11 {offsets = [0, 0, 24], sizes = [2, 8, 8], strides = [1, 1, 1]} : vector<2x8x96xf32> to vector<2x8x8xf32>
    %cst_87 = arith.constant 0.353553385 : f32
    %188 = vector.broadcast %cst_87 : f32 to vector<2x8x8xf32>
    %189 = arith.mulf %187, %188 : vector<2x8x8xf32>
    %190 = vector.extract_strided_slice %11 {offsets = [0, 0, 56], sizes = [2, 8, 8], strides = [1, 1, 1]} : vector<2x8x96xf32> to vector<2x8x8xf32>
    %191 = vector.extract_strided_slice %11 {offsets = [0, 0, 88], sizes = [2, 8, 8], strides = [1, 1, 1]} : vector<2x8x96xf32> to vector<2x8x8xf32>
    %192 = arith.truncf %189 : vector<2x8x8xf32> to vector<2x8x8xbf16>
    %193 = arith.truncf %190 : vector<2x8x8xf32> to vector<2x8x8xbf16>
    "tpu.trace_start"() <{level = 10 : i32, message = "bqd,bkd->bqk"}> : () -> ()
    %cst_88 = arith.constant dense<0.000000e+00> : vector<2x8x8xf32>
    %194 = tpu.matmul %192, %193, %cst_88 {dimension_numbers = #tpu.dot_dimension_numbers<[2], [2], [1], [1], [0, 0, 0, 1, 1, 1], [0], [0]>} : vector<2x8x8xbf16>, vector<2x8x8xbf16>, vector<2x8x8xf32> -> vector<2x8x8xf32>
    "tpu.trace_stop"() : () -> ()
    %c0_i32_89 = arith.constant 0 : i32
    %195 = arith.addi %3, %c0_i32_89 : i32
    %c4_i32_90 = arith.constant 4 : i32
    %196 = arith.muli %195, %c4_i32_90 : i32
    %c3_i32 = arith.constant 3 : i32
    %197 = arith.addi %196, %c3_i32 : i32
    %c2_i32_91 = arith.constant 2 : i32
    %c0_i32_92 = arith.constant 0 : i32
    %198 = arith.cmpi eq, %c2_i32_91, %c0_i32_92 : i32
    %c1_i32_93 = arith.constant 1 : i32
    %199 = arith.select %198, %c1_i32_93, %c2_i32_91 : i32
    %200 = arith.remsi %197, %199 : i32
    %c0_i32_94 = arith.constant 0 : i32
    %201 = arith.cmpi ne, %200, %c0_i32_94 : i32
    %c0_i32_95 = arith.constant 0 : i32
    %202 = arith.cmpi slt, %200, %c0_i32_95 : i32
    %c0_i32_96 = arith.constant 0 : i32
    %203 = arith.cmpi slt, %199, %c0_i32_96 : i32
    %204 = arith.xori %202, %203 : i1
    %205 = arith.andi %204, %201 : i1
    %206 = arith.addi %200, %199 : i32
    %207 = arith.select %205, %206, %200 : i32
    %208 = arith.index_cast %207 : i32 to index
    %c0_97 = arith.constant 0 : index
    %c0_98 = arith.constant 0 : index
    %209 = vector.load %arg9[%208, %c0_97, %c0_98] : memref<2x8x8xf32, #tpu.memory_space<vmem>>, vector<1x8x8xf32>
    %210 = vector.shape_cast %209 : vector<1x8x8xf32> to vector<8x8xf32>
    %c1_i32_99 = arith.constant 1 : i32
    %211 = arith.addi %3, %c1_i32_99 : i32
    %c4_i32_100 = arith.constant 4 : i32
    %212 = arith.muli %211, %c4_i32_100 : i32
    %c3_i32_101 = arith.constant 3 : i32
    %213 = arith.addi %212, %c3_i32_101 : i32
    %c2_i32_102 = arith.constant 2 : i32
    %c0_i32_103 = arith.constant 0 : i32
    %214 = arith.cmpi eq, %c2_i32_102, %c0_i32_103 : i32
    %c1_i32_104 = arith.constant 1 : i32
    %215 = arith.select %214, %c1_i32_104, %c2_i32_102 : i32
    %216 = arith.remsi %213, %215 : i32
    %c0_i32_105 = arith.constant 0 : i32
    %217 = arith.cmpi ne, %216, %c0_i32_105 : i32
    %c0_i32_106 = arith.constant 0 : i32
    %218 = arith.cmpi slt, %216, %c0_i32_106 : i32
    %c0_i32_107 = arith.constant 0 : i32
    %219 = arith.cmpi slt, %215, %c0_i32_107 : i32
    %220 = arith.xori %218, %219 : i1
    %221 = arith.andi %220, %217 : i1
    %222 = arith.addi %216, %215 : i32
    %223 = arith.select %221, %222, %216 : i32
    %224 = arith.index_cast %223 : i32 to index
    %c0_108 = arith.constant 0 : index
    %c0_109 = arith.constant 0 : index
    %225 = vector.load %arg9[%224, %c0_108, %c0_109] : memref<2x8x8xf32, #tpu.memory_space<vmem>>, vector<1x8x8xf32>
    %226 = vector.shape_cast %225 : vector<1x8x8xf32> to vector<8x8xf32>
    %227 = vector.shape_cast %210 : vector<8x8xf32> to vector<1x8x8xf32>
    %228 = vector.shape_cast %226 : vector<8x8xf32> to vector<1x8x8xf32>
    %229 = tpu.concatenate %227, %228 in 0 : vector<1x8x8xf32>, vector<1x8x8xf32> -> vector<2x8x8xf32>
    %230 = arith.mulf %194, %229 : vector<2x8x8xf32>
    %cst_110 = arith.constant dense<0xFF800000> : vector<2x8xf32>
    %231 = vector.multi_reduction <maximumf>, %230, %cst_110 [2] : vector<2x8x8xf32> to vector<2x8xf32>
    %232 = vector.shape_cast %231 : vector<2x8xf32> to vector<2x8x1xf32>
    %233 = vector.broadcast %232 : vector<2x8x1xf32> to vector<2x8x8xf32>
    %234 = arith.subf %230, %233 : vector<2x8x8xf32>
    %235 = math.exp %234 : vector<2x8x8xf32>
    %cst_111 = arith.constant dense<0.000000e+00> : vector<2x8xf32>
    %236 = vector.multi_reduction <add>, %235, %cst_111 [2] : vector<2x8x8xf32> to vector<2x8xf32>
    %237 = vector.shape_cast %236 : vector<2x8xf32> to vector<2x8x1xf32>
    %238 = tpu.reciprocal %237 {approx = true} : vector<2x8x1xf32> -> vector<2x8x1xf32>
    %239 = vector.broadcast %238 : vector<2x8x1xf32> to vector<2x8x8xf32>
    %240 = arith.mulf %235, %239 : vector<2x8x8xf32>
    %241 = arith.addf %183, %240 : vector<2x8x8xf32>
    %242 = arith.truncf %240 : vector<2x8x8xf32> to vector<2x8x8xbf16>
    %243 = arith.truncf %191 : vector<2x8x8xf32> to vector<2x8x8xbf16>
    "tpu.trace_start"() <{level = 10 : i32, message = "bqk,bkd->bqd"}> : () -> ()
    %cst_112 = arith.constant dense<0.000000e+00> : vector<2x8x8xf32>
    %244 = tpu.matmul %242, %243, %cst_112 {dimension_numbers = #tpu.dot_dimension_numbers<[2], [1], [1], [2], [0, 0, 0, 1, 1, 2], [0], [0]>} : vector<2x8x8xbf16>, vector<2x8x8xbf16>, vector<2x8x8xf32> -> vector<2x8x8xf32>
    "tpu.trace_stop"() : () -> ()
    %245 = tpu.concatenate %70, %128, %186, %244 in 2 : vector<2x8x8xf32>, vector<2x8x8xf32>, vector<2x8x8xf32>, vector<2x8x8xf32> -> vector<2x8x32xf32>
    %246 = vector.shape_cast %245 : vector<2x8x32xf32> to vector<16x32xf32>
    %247 = arith.truncf %246 : vector<16x32xf32> to vector<16x32xbf16>
    %c0_113 = arith.constant 0 : index
    %c0_114 = arith.constant 0 : index
    %248 = vector.load %arg5[%c0_113, %c0_114] : memref<32x32xbf16, #tpu.memory_space<vmem>>, vector<32x32xbf16>
    %cst_115 = arith.constant dense<0.000000e+00> : vector<16x32xf32>
    %249 = tpu.matmul %247, %248, %cst_115 {dimension_numbers = #tpu.dot_dimension_numbers<[1], [0], [0], [1], [0, 0, 1, 1], [], []>} : vector<16x32xbf16>, vector<32x32xbf16>, vector<16x32xf32> -> vector<16x32xf32>
    %c0_116 = arith.constant 0 : index
    %c0_117 = arith.constant 0 : index
    %250 = vector.load %arg6[%c0_116, %c0_117] : memref<1x32xf32, #tpu.memory_space<vmem>>, vector<1x32xf32>
    %251 = vector.broadcast %250 : vector<1x32xf32> to vector<16x32xf32>
    %252 = arith.addf %249, %251 : vector<16x32xf32>
    %253 = vector.shape_cast %252 : vector<16x32xf32> to vector<2x8x32xf32>
    %c0_118 = arith.constant 0 : index
    %c0_119 = arith.constant 0 : index
    %c0_120 = arith.constant 0 : index
    %254 = vector.load %arg7[%c0_118, %c0_119, %c0_120] : memref<2x8x32xf32, #tpu.memory_space<vmem>>, vector<2x8x32xf32>
    tpu.vector_store %arg7[%c0_118, %c0_119, %c0_120], %253 {strides = array<i32>} : memref<2x8x32xf32, #tpu.memory_space<vmem>>, vector<2x8x32xf32>,
    %cst_121 = arith.constant 2.500000e-01 : f32
    %255 = vector.broadcast %cst_121 : f32 to vector<2x8x8xf32>
    %256 = arith.mulf %241, %255 : vector<2x8x8xf32>
    %c0_122 = arith.constant 0 : index
    %c0_123 = arith.constant 0 : index
    %c0_124 = arith.constant 0 : index
    %257 = vector.load %arg8[%c0_122, %c0_123, %c0_124] : memref<2x8x8xf32, #tpu.memory_space<vmem>>, vector<2x8x8xf32>
    tpu.vector_store %arg8[%c0_122, %c0_123, %c0_124], %256 {strides = array<i32>} : memref<2x8x8xf32, #tpu.memory_space<vmem>>, vector<2x8x8xf32>,
    return
  }
  func.func @transform_0(%arg0: i32) -> (i32, i32, i32) {
    %c0_i32 = arith.constant 0 : i32
    %c0_i32_0 = arith.constant 0 : i32
    %c0_i32_1 = arith.constant 0 : i32
    return %arg0, %c0_i32, %c0_i32_0 : i32, i32, i32
  }
  func.func @transform_1(%arg0: i32) -> (i32, i32, i32) {
    %c0_i32 = arith.constant 0 : i32
    %c0_i32_0 = arith.constant 0 : i32
    %c0_i32_1 = arith.constant 0 : i32
    %c0_i32_2 = arith.constant 0 : i32
    return %c0_i32, %c0_i32_0, %c0_i32_1 : i32, i32, i32
  }
  func.func @transform_2(%arg0: i32) -> (i32, i32) {
    %c0_i32 = arith.constant 0 : i32
    %c0_i32_0 = arith.constant 0 : i32
    %c0_i32_1 = arith.constant 0 : i32
    return %c0_i32, %c0_i32_0 : i32, i32
  }
  func.func @transform_3(%arg0: i32) -> (i32, i32) {
    %c0_i32 = arith.constant 0 : i32
    %c0_i32_0 = arith.constant 0 : i32
    %c0_i32_1 = arith.constant 0 : i32
    return %c0_i32, %c0_i32_0 : i32, i32
  }
  func.func @transform_4(%arg0: i32) -> (i32, i32) {
    %c0_i32 = arith.constant 0 : i32
    %c0_i32_0 = arith.constant 0 : i32
    %c0_i32_1 = arith.constant 0 : i32
    return %c0_i32, %c0_i32_0 : i32, i32
  }
  func.func @transform_5(%arg0: i32) -> (i32, i32) {
    %c0_i32 = arith.constant 0 : i32
    %c0_i32_0 = arith.constant 0 : i32
    %c0_i32_1 = arith.constant 0 : i32
    return %c0_i32, %c0_i32_0 : i32, i32
  }
  func.func @transform_6(%arg0: i32) -> (i32, i32, i32) {
    %c0_i32 = arith.constant 0 : i32
    %c0_i32_0 = arith.constant 0 : i32
    %c0_i32_1 = arith.constant 0 : i32
    return %arg0, %c0_i32, %c0_i32_0 : i32, i32, i32
  }
  func.func @transform_7(%arg0: i32) -> (i32, i32, i32) {
    %c0_i32 = arith.constant 0 : i32
    %c0_i32_0 = arith.constant 0 : i32
    %c0_i32_1 = arith.constant 0 : i32
    return %arg0, %c0_i32, %c0_i32_0 : i32, i32, i32
  }
}

</mosaic_0001>

<llo_original>
// kernel: multihead_attention_custom_attn.1
$region0: #{multihead_attention_custom_attn.1}
  #allocation0 [shape = 'u32[]', space=smem, size = 0x4, offset = 0x4, fixed_abs, tag = 'smem constant byte address 0x4 - core index']
  #allocation1 [shape = 'u32[72,128]{1,0:T(1,128)}', space=vmem, size = 0x9000, scoped, tag = 'internal scratch']
  #allocation2 [shape = 'f32[2,8,8]{2,1,0:T(8,128)}', space=vmem, size = 0x2000, scoped, tag = 'scratch operand']
  %s0 = inlined_call_operand.vmem [shape: bf16[2,8,32], index: 0, kind: input, shape index: {}]
  %s1 = inlined_call_operand.vmem [shape: f32[2,16,8], index: 1, kind: input, shape index: {}]
  %s2 = inlined_call_operand.vmem [shape: bf16[32,96], index: 2, kind: input, shape index: {}]
  %s3 = inlined_call_operand.vmem [shape: f32[1,96], index: 3, kind: input, shape index: {}]
  %s4 = inlined_call_operand.vmem [shape: bf16[32,32], index: 4, kind: input, shape index: {}]
  %s5 = inlined_call_operand.vmem [shape: f32[1,32], index: 5, kind: input, shape index: {}]
  %s6 = inlined_call_operand.vmem [shape: f32[2,8,32], index: 6, kind: output, shape index: {0}]
  %s7 = inlined_call_operand.hbm [shape: f32[2,8,8], index: 7, kind: output, shape index: {1}]
  %8 = xla_tuple %s6, %s7
  %s9 = sld [smem:[#allocation0]]
  $region46: #{multihead_attention_custom_attn.1} parent=0
    _
  %s11 = ssub.s32 1, %s9
  %s12 = scalar_select 0, %s11, %s9
  $region1: #{multihead_attention_custom_attn.1} parent=0
    #allocation3 [shape = 'u8[8192]{0}', space=vmem, size = 0x2000, scoped, tag = 'output window, operand 1, single buffered']
    #allocation4 [shape = 's32[1]{0}', space=sflag, size = 0x4, scoped, tag = 'scoped memory for multihead_attention_custom_attn.1']
    %13 = vsyncpa [#allocation4], 0
    // Predicated region
    $region2: #{multihead_attention_custom_attn.1} parent=1 // pred_check
      _
    $region3: #{multihead_attention_custom_attn.1} parent=1 // pred_check_branch
      %15 = sbr.rel (0) target = $region5
    $region4: #{multihead_attention_custom_attn.1} parent=1 // pred_region
      _
    $region5: #{multihead_attention_custom_attn.1} parent=1 // pred_fallthru
      _
    // Predicated region
    $region6: #{multihead_attention_custom_attn.1} parent=1 // pred_check
      _
    $region7: #{multihead_attention_custom_attn.1} parent=1 // pred_check_branch
      %17 = sbr.rel (0) target = $region9
    $region8: #{multihead_attention_custom_attn.1} parent=1 // pred_region
      _
    $region9: #{multihead_attention_custom_attn.1} parent=1 // pred_fallthru
      _
    // Predicated region
    $region10: #{multihead_attention_custom_attn.1} parent=1 // pred_check
      _
    $region11: #{multihead_attention_custom_attn.1} parent=1 // pred_check_branch
      %19 = sbr.rel (0) target = $region13
    $region12: #{multihead_attention_custom_attn.1} parent=1 // pred_region
      _
    $region13: #{multihead_attention_custom_attn.1} parent=1 // pred_fallthru
      _
    // Predicated region
    $region14: #{multihead_attention_custom_attn.1} parent=1 // pred_check
      _
    $region15: #{multihead_attention_custom_attn.1} parent=1 // pred_check_branch
      %21 = sbr.rel (0) target = $region17
    $region16: #{multihead_attention_custom_attn.1} parent=1 // pred_region
      _
    $region17: #{multihead_attention_custom_attn.1} parent=1 // pred_fallthru
      _
    // Predicated region
    $region18: #{multihead_attention_custom_attn.1} parent=1 // pred_check
      _
    $region19: #{multihead_attention_custom_attn.1} parent=1 // pred_check_branch
      %23 = sbr.rel (0) target = $region21
    $region20: #{multihead_attention_custom_attn.1} parent=1 // pred_region
      _
    $region21: #{multihead_attention_custom_attn.1} parent=1 // pred_fallthru
      _
    // Predicated region
    $region22: #{multihead_attention_custom_attn.1} parent=1 // pred_check
      _
    $region23: #{multihead_attention_custom_attn.1} parent=1 // pred_check_branch
      %25 = sbr.rel (0) target = $region25
    $region24: #{multihead_attention_custom_attn.1} parent=1 // pred_region
      _
    $region25: #{multihead_attention_custom_attn.1} parent=1 // pred_fallthru
      _
    %p27 = scmp.eq.s32.totalorder 0, 0
    // Predicated region
    $region26: #{multihead_attention_custom_attn.1} parent=1 // pred_check
      %p28 = pneg %p27
    $region27: #{multihead_attention_custom_attn.1} parent=1 // pred_check_branch
      %30 = sbr.rel (%p28) target = $region29
    $region28: #{multihead_attention_custom_attn.1} parent=1 // pred_region
      %v31 = vld [vmem:[%s1] sm:$0xff]
      %v32 = vld [vmem:[%s1 + $0x8] sm:$0xff]
      %v33 = vand.u32 2147483647, %v31
      %v34 = vand.u32 2147483647, %v32
      %vm35 = vcmask 64512
      %v36 = vsel %vm35, %v33, 0.0
      %v37 = vsel %vm35, %v34, 0.0
      %v38 = vadd.f32 %v36, %v37
      %v39 = vrot.slane %v38, 4
      %v40 = vadd.f32 %v38, %v39
      %v41 = vrot.slane %v40, 2
      %v42 = vadd.f32 %v40, %v41
      %v43 = vrot.slane %v42, 1
      %v44 = vadd.f32 %v42, %v43
      %v45 = vmax.f32 %v44, 1e-12
      %v46 = vrcp.pop %v45
      %v47 = vmul.f32 %v45, %v46
      %v48 = vsub.f32 1.0, %v47
      %v49 = vmul.f32 %v46, %v48
      %v50 = vadd.f32 %v46, %v49
      %vm51 = vweird.f32 %v45
      %vm52 = vweird.f32 %v46
      %vm53 = vmor %vm51, %vm52
      %v54 = vsel %vm53, %v46, %v50
      %v55 = vand.u32 2147483647, %v45
      %vm56 = vcmp.eq.f32.partialorder %v55, 8.507059e+37
      %v57 = vand.u32 %v45, 2147483648
      %v58 = vor.u32 1.1754944e-38, %v57
      %v59 = vsel %vm56, %v58, %v54
      %v60 = vmul.f32 %v31, %v59
      %v61 = vmul.f32 %v32, %v59
      %v62 = vpack.c.bf16 %v61, %v60
      %63 = vxpose.xlu0.c.b16.start [1/8] %v62, 128
      %64 = vxpose.xlu0.c.b16.cont [2/8] 0, 128
      %65 = vxpose.xlu0.c.b16.cont [3/8] 0, 128
      %66 = vxpose.xlu0.c.b16.cont [4/8] 0, 128
      %67 = vxpose.xlu0.c.b16.cont [5/8] 0, 128
      %68 = vxpose.xlu0.c.b16.cont [6/8] 0, 128
      %69 = vxpose.xlu0.c.b16.cont [7/8] 0, 128
      %70 = vxpose.xlu0.c.b16.end [8/8] 0, 128
      %v71 = vpop.trf.xlu0
      %v72 = vpop.trf.xlu0
      %v73 = vpop.trf.xlu0
      %v74 = vpop.trf.xlu0
      %v75 = vpop.trf.xlu0
      %v76 = vpop.trf.xlu0
      %v77 = vpop.trf.xlu0
      %v78 = vpop.trf.xlu0
      %vm79 = vcmask 130048
      %v81 = vsel %vm79, %v71, 0
      %83 = vmatpush.bf16.msra.mxu0 0
      %84 = vmatpush.bf16.msra.mxu0 0
      %85 = vmatpush.bf16.msra.mxu0 0
      %86 = vmatpush.bf16.msra.mxu0 0
      %87 = vmatpush.bf16.msra.mxu0 0
      %88 = vmatpush.bf16.msra.mxu0 0
      %89 = vmatpush.bf16.msra.mxu0 0
      %90 = vmatpush.bf16.msra.mxu0 %v62
      %91 = vmatmul.bf16.gmra.mxu0 %v81
      %v92 = vpop.f32.mrf.mxu0
      %v93 = vadd.f32 0.0, %v92
      %v94 = vpop.f32.mrf.mxu0
      %95 = vdwg.mxu0
      %v96 = vsel %vm35, %v93, -inf
      %97 = vmax.xlane.f32.xlu0 %v96
      %v98 = vpop.xlane.xlu0 %97
      %v99 = vsub.f32 %v93, %v98
      %v100 = vmul.f32 %v99, 1.442695
      %v101 = vpow.pop %v100
      %v102 = vsel %vm35, %v101, 0.0
      %103 = vadd.xlane.f32.xlu0 %v102
      %v104 = vpop.xlane.xlu0 %103
      %v105 = vrcp.pop %v104
      %v106 = vmul.f32 %v101, %v105
      %107 = vst.msk [vmem:[#allocation2] sm:$0xff] %vm35, %v106
      %s108 = scalar_lea.vmem %s1, 16
      %v109 = vld [vmem:[%s108] sm:$0xff]
      %v110 = vld [vmem:[%s108 + $0x8] sm:$0xff]
      %v111 = vand.u32 2147483647, %v109
      %v112 = vand.u32 2147483647, %v110
      %v113 = vsel %vm35, %v111, 0.0
      %v114 = vsel %vm35, %v112, 0.0
      %v115 = vadd.f32 %v113, %v114
      %v116 = vrot.slane %v115, 4
      %v117 = vadd.f32 %v115, %v116
      %v118 = vrot.slane %v117, 2
      %v119 = vadd.f32 %v117, %v118
      %v120 = vrot.slane %v119, 1
      %v121 = vadd.f32 %v119, %v120
      %v122 = vmax.f32 %v121, 1e-12
      %v123 = vrcp.pop %v122
      %v124 = vmul.f32 %v122, %v123
      %v125 = vsub.f32 1.0, %v124
      %v126 = vmul.f32 %v123, %v125
      %v127 = vadd.f32 %v123, %v126
      %vm128 = vweird.f32 %v122
      %vm129 = vweird.f32 %v123
      %vm130 = vmor %vm128, %vm129
      %v131 = vsel %vm130, %v123, %v127
      %v132 = vand.u32 2147483647, %v122
      %vm133 = vcmp.eq.f32.partialorder %v132, 8.507059e+37
      %v134 = vand.u32 %v122, 2147483648
      %v135 = vor.u32 1.1754944e-38, %v134
      %v136 = vsel %vm133, %v135, %v131
      %v137 = vmul.f32 %v109, %v136
      %v138 = vmul.f32 %v110, %v136
      %v139 = vpack.c.bf16 %v138, %v137
      %140 = vxpose.xlu0.c.b16.start [1/8] %v139, 128
      %141 = vxpose.xlu0.c.b16.cont [2/8] 0, 128
      %142 = vxpose.xlu0.c.b16.cont [3/8] 0, 128
      %143 = vxpose.xlu0.c.b16.cont [4/8] 0, 128
      %144 = vxpose.xlu0.c.b16.cont [5/8] 0, 128
      %145 = vxpose.xlu0.c.b16.cont [6/8] 0, 128
      %146 = vxpose.xlu0.c.b16.cont [7/8] 0, 128
      %147 = vxpose.xlu0.c.b16.end [8/8] 0, 128
      %v148 = vpop.trf.xlu0
      %v149 = vpop.trf.xlu0
      %v150 = vpop.trf.xlu0
      %v151 = vpop.trf.xlu0
      %v152 = vpop.trf.xlu0
      %v153 = vpop.trf.xlu0
      %v154 = vpop.trf.xlu0
      %v155 = vpop.trf.xlu0
      %v157 = vsel %vm79, %v148, 0
      %159 = vmatpush.bf16.msra.mxu0 0
      %160 = vmatpush.bf16.msra.mxu0 0
      %161 = vmatpush.bf16.msra.mxu0 0
      %162 = vmatpush.bf16.msra.mxu0 0
      %163 = vmatpush.bf16.msra.mxu0 0
      %164 = vmatpush.bf16.msra.mxu0 0
      %165 = vmatpush.bf16.msra.mxu0 0
      %166 = vmatpush.bf16.msra.mxu0 %v139
      %167 = vmatmul.bf16.gmra.mxu0 %v157
      %v168 = vpop.f32.mrf.mxu0
      %v169 = vadd.f32 0.0, %v168
      %v170 = vpop.f32.mrf.mxu0
      %171 = vdwg.mxu0
      %v172 = vsel %vm35, %v169, -inf
      %173 = vmax.xlane.f32.xlu0 %v172
      %v174 = vpop.xlane.xlu0 %173
      %v175 = vsub.f32 %v169, %v174
      %v176 = vmul.f32 %v175, 1.442695
      %v177 = vpow.pop %v176
      %v178 = vsel %vm35, %v177, 0.0
      %179 = vadd.xlane.f32.xlu0 %v178
      %v180 = vpop.xlane.xlu0 %179
      %v181 = vrcp.pop %v180
      %v182 = vmul.f32 %v177, %v181
      %s183 = scalar_lea.vmem [#allocation2], 8
      %184 = vst.msk [vmem:[%s183] sm:$0xff] %vm35, %v182
    $region29: #{multihead_attention_custom_attn.1} parent=1 // pred_fallthru
      _
    %s185 = smul.u32 0, 2
    %v186 = vld [vmem:[%s0] sm:$0xf]
    %v187 = vld [vmem:[%s0 + $0x4] sm:$0xf]
    %v188 = vld [vmem:[%s2] sm:$0xf]
    %v189 = vld [vmem:[%s2 + $0x4] sm:$0xf]
    %v190 = vld [vmem:[%s2 + $0x8] sm:$0xf]
    %v191 = vld [vmem:[%s2 + $0xc] sm:$0xf]
    %v192 = vld [vmem:[%s3] sm:$0x1]
    %v194 = vperm.slane %v192, 0
    %v198 = vunpack.c.l.b16 %v186
    %v199 = vunpack.c.l.b16 %v187
    %v200 = vpack.c.b16 %v199, %v198
    %v205 = vunpack.c.l.b16 %v188
    %v206 = vunpack.c.l.b16 %v189
    %v207 = vunpack.c.l.b16 %v190
    %v208 = vunpack.c.l.b16 %v191
    %v209 = vpack.c.b16 %v206, %v205
    %v210 = vpack.c.b16 %v208, %v207
    %vm213 = vcmask 261120
    %v215 = vsel %vm213, %v200, 0
    %217 = vmatpush.bf16.msra.mxu0 0
    %218 = vmatpush.bf16.msra.mxu0 0
    %219 = vmatpush.bf16.msra.mxu0 0
    %220 = vmatpush.bf16.msra.mxu0 0
    %221 = vmatpush.bf16.msra.mxu0 0
    %222 = vmatpush.bf16.msra.mxu0 0
    %223 = vmatpush.bf16.msra.mxu0 %v210
    %224 = vmatpush.bf16.msra.mxu0 %v209
    %225 = vmatmul.bf16.gmra.mxu0 %v215
    %v226 = vpop.f32.mrf.mxu0
    %v227 = vadd.f32 %v194, %v226
    %v228 = vpop.f32.mrf.mxu0
    %v229 = vadd.f32 %v194, %v228
    %230 = vdwg.mxu0
    %v231 = vmul.f32 %v227, 0.35355338
    %v232 = vmul.f32 %v229, 0.35355338
    %v233 = vpack.c.bf16 %v231, %v231
    %v234 = vpack.c.bf16 %v232, %v232
    %v235 = vpack.c.bf16 %v227, %v227
    %v236 = vpack.c.bf16 %v229, %v229
    %v238 = vunpack.c.l.b16 %v235
    %v239 = vpack.c.b16 %v238, %v238
    %240 = vrot.lane.b32.xlu0 %v239, 96
    %v241 = vpop.permute.xlu0 %240
    %vm242 = vcmask 64512
    %v244 = vsel %vm242, %v233, 0
    %v247 = vsel %vm242, %v241, 0
    %249 = vmatpush.bf16.xpose.msra.mxu0 0
    %250 = vmatpush.bf16.xpose.msra.mxu0 0
    %251 = vmatpush.bf16.xpose.msra.mxu0 0
    %252 = vmatpush.bf16.xpose.msra.mxu0 0
    %253 = vmatpush.bf16.xpose.msra.mxu0 0
    %254 = vmatpush.bf16.xpose.msra.mxu0 0
    %255 = vmatpush.bf16.xpose.msra.mxu0 0
    %256 = vmatpush.bf16.xpose.msra.mxu0 %v247
    %257 = vmatmul.bf16.gmra.mxu0 %v244
    %v258 = vpop.f32.mrf.mxu0
    %v259 = vadd.f32 0.0, %v258
    %v260 = vpop.f32.mrf.mxu0
    %261 = vdwg.mxu0
    %v263 = vunpack.c.l.b16 %v236
    %v264 = vpack.c.b16 %v263, %v263
    %265 = vrot.lane.b32.xlu0 %v264, 96
    %v266 = vpop.permute.xlu0 %265
    %v268 = vsel %vm242, %v234, 0
    %v271 = vsel %vm242, %v266, 0
    %273 = vmatpush.bf16.xpose.msra.mxu0 0
    %274 = vmatpush.bf16.xpose.msra.mxu0 0
    %275 = vmatpush.bf16.xpose.msra.mxu0 0
    %276 = vmatpush.bf16.xpose.msra.mxu0 0
    %277 = vmatpush.bf16.xpose.msra.mxu0 0
    %278 = vmatpush.bf16.xpose.msra.mxu0 0
    %279 = vmatpush.bf16.xpose.msra.mxu0 0
    %280 = vmatpush.bf16.xpose.msra.mxu0 %v271
    %281 = vmatmul.bf16.gmra.mxu0 %v268
    %v282 = vpop.f32.mrf.mxu0
    %v283 = vadd.f32 0.0, %v282
    %v284 = vpop.f32.mrf.mxu0
    %285 = vdwg.mxu0
    %s286 = smul.u32 0, 8
    %p287 = scmp.lt.s32.totalorder %s286, 0
    %s288 = ssub.s32 0, %s286
    %s289 = scalar_select %p287, %s288, %s286
    %s290 = sand.u32 %s289, 1
    %s291 = ssub.s32 0, %s290
    %s292 = scalar_select %p287, %s291, %s290
    %p293 = scmp.ne.s32.totalorder %s292, 0
    %p294 = scmp.lt.s32.totalorder %s292, 0
    %p295 = pnand %p294, %p293
    %p296 = pneg %p295
    %s297 = sadd.s32 %s292, 2
    %s298 = scalar_select %p296, %s297, %s292
    %s299 = smul.u32 %s298, 8
    %s300 = scalar_lea.vmem [#allocation2], %s299
    %v301 = vld [vmem:[%s300] sm:$0xff]
    %s302 = sadd.s32 %s185, 1
    %s303 = smul.u32 %s302, 4
    %p304 = scmp.lt.s32.totalorder %s303, 0
    %s305 = ssub.s32 0, %s303
    %s306 = scalar_select %p304, %s305, %s303
    %s307 = sand.u32 %s306, 1
    %s308 = ssub.s32 0, %s307
    %s309 = scalar_select %p304, %s308, %s307
    %p310 = scmp.ne.s32.totalorder %s309, 0
    %p311 = scmp.lt.s32.totalorder %s309, 0
    %p312 = pnand %p311, %p310
    %p313 = pneg %p312
    %s314 = sadd.s32 %s309, 2
    %s315 = scalar_select %p313, %s314, %s309
    %s316 = smul.u32 %s315, 8
    %s317 = scalar_lea.vmem [#allocation2], %s316
    %v318 = vld [vmem:[%s317] sm:$0xff]
    %v319 = vmul.f32 %v259, %v301
    %v320 = vmul.f32 %v283, %v318
    %v321 = vsel %vm242, %v319, -inf
    %322 = vmax.xlane.f32.xlu0 %v321
    %v323 = vpop.xlane.xlu0 %322
    %v324 = vsel %vm242, %v320, -inf
    %325 = vmax.xlane.f32.xlu0 %v324
    %v326 = vpop.xlane.xlu0 %325
    %v327 = vsub.f32 %v319, %v323
    %v328 = vsub.f32 %v320, %v326
    %v329 = vmul.f32 %v327, 1.442695
    %v330 = vpow.pop %v329
    %v331 = vmul.f32 %v328, 1.442695
    %v332 = vpow.pop %v331
    %v333 = vsel %vm242, %v330, 0.0
    %334 = vadd.xlane.f32.xlu0 %v333
    %v335 = vpop.xlane.xlu0 %334
    %v336 = vsel %vm242, %v332, 0.0
    %337 = vadd.xlane.f32.xlu0 %v336
    %v338 = vpop.xlane.xlu0 %337
    %v339 = vrcp.pop %v335
    %v340 = vrcp.pop %v338
    %v341 = vmul.f32 %v330, %v339
    %v342 = vmul.f32 %v332, %v340
    %v343 = vadd.f32 %v341, 0.0
    %v344 = vadd.f32 %v342, 0.0
    %v345 = vpack.c.bf16 %v341, %v341
    %v346 = vpack.c.bf16 %v342, %v342
    %347 = vrot.lane.b32.xlu0 %v239, 64
    %v348 = vpop.permute.xlu0 %347
    %v350 = vsel %vm242, %v345, 0
    %vm352 = vcmask 1043456
    %v354 = vsel %vm352, %v348, 0
    %356 = vmatpush.bf16.msra.mxu0 0
    %357 = vmatpush.bf16.msra.mxu0 0
    %358 = vmatpush.bf16.msra.mxu0 0
    %359 = vmatpush.bf16.msra.mxu0 0
    %360 = vmatpush.bf16.msra.mxu0 0
    %361 = vmatpush.bf16.msra.mxu0 0
    %362 = vmatpush.bf16.msra.mxu0 0
    %363 = vmatpush.bf16.msra.mxu0 %v354
    %364 = vmatmul.bf16.gmra.mxu0 %v350
    %v365 = vpop.f32.mrf.mxu0
    %v366 = vadd.f32 0.0, %v365
    %v367 = vpop.f32.mrf.mxu0
    %368 = vdwg.mxu0
    %369 = vrot.lane.b32.xlu0 %v264, 64
    %v370 = vpop.permute.xlu0 %369
    %v372 = vsel %vm242, %v346, 0
    %v375 = vsel %vm352, %v370, 0
    %377 = vmatpush.bf16.msra.mxu0 0
    %378 = vmatpush.bf16.msra.mxu0 0
    %379 = vmatpush.bf16.msra.mxu0 0
    %380 = vmatpush.bf16.msra.mxu0 0
    %381 = vmatpush.bf16.msra.mxu0 0
    %382 = vmatpush.bf16.msra.mxu0 0
    %383 = vmatpush.bf16.msra.mxu0 0
    %384 = vmatpush.bf16.msra.mxu0 %v375
    %385 = vmatmul.bf16.gmra.mxu0 %v372
    %v386 = vpop.f32.mrf.mxu0
    %v387 = vadd.f32 0.0, %v386
    %v388 = vpop.f32.mrf.mxu0
    %389 = vdwg.mxu0
    %v391 = vunpack.c.l.b16 %v233
    %v392 = vpack.c.b16 %v391, %v391
    %393 = vrot.lane.b32.xlu0 %v392, 120
    %v394 = vpop.permute.xlu0 %393
    %395 = vrot.lane.b32.xlu0 %v239, 88
    %v396 = vpop.permute.xlu0 %395
    %v398 = vsel %vm242, %v394, 0
    %v401 = vsel %vm242, %v396, 0
    %403 = vmatpush.bf16.xpose.msra.mxu0 0
    %404 = vmatpush.bf16.xpose.msra.mxu0 0
    %405 = vmatpush.bf16.xpose.msra.mxu0 0
    %406 = vmatpush.bf16.xpose.msra.mxu0 0
    %407 = vmatpush.bf16.xpose.msra.mxu0 0
    %408 = vmatpush.bf16.xpose.msra.mxu0 0
    %409 = vmatpush.bf16.xpose.msra.mxu0 0
    %410 = vmatpush.bf16.xpose.msra.mxu0 %v401
    %411 = vmatmul.bf16.gmra.mxu0 %v398
    %v412 = vpop.f32.mrf.mxu0
    %v413 = vadd.f32 0.0, %v412
    %v414 = vpop.f32.mrf.mxu0
    %415 = vdwg.mxu0
    %v417 = vunpack.c.l.b16 %v234
    %v418 = vpack.c.b16 %v417, %v417
    %419 = vrot.lane.b32.xlu0 %v418, 120
    %v420 = vpop.permute.xlu0 %419
    %421 = vrot.lane.b32.xlu0 %v264, 88
    %v422 = vpop.permute.xlu0 %421
    %v424 = vsel %vm242, %v420, 0
    %v427 = vsel %vm242, %v422, 0
    %429 = vmatpush.bf16.xpose.msra.mxu0 0
    %430 = vmatpush.bf16.xpose.msra.mxu0 0
    %431 = vmatpush.bf16.xpose.msra.mxu0 0
    %432 = vmatpush.bf16.xpose.msra.mxu0 0
    %433 = vmatpush.bf16.xpose.msra.mxu0 0
    %434 = vmatpush.bf16.xpose.msra.mxu0 0
    %435 = vmatpush.bf16.xpose.msra.mxu0 0
    %436 = vmatpush.bf16.xpose.msra.mxu0 %v427
    %437 = vmatmul.bf16.gmra.mxu0 %v424
    %v438 = vpop.f32.mrf.mxu0
    %v439 = vadd.f32 0.0, %v438
    %v440 = vpop.f32.mrf.mxu0
    %441 = vdwg.mxu0
    %s442 = sadd.s32 %s286, 1
    %p443 = scmp.lt.s32.totalorder %s442, 0
    %s444 = ssub.s32 0, %s442
    %s445 = scalar_select %p443, %s444, %s442
    %s446 = sand.u32 %s445, 1
    %s447 = ssub.s32 0, %s446
    %s448 = scalar_select %p443, %s447, %s446
    %p449 = scmp.ne.s32.totalorder %s448, 0
    %p450 = scmp.lt.s32.totalorder %s448, 0
    %p451 = pnand %p450, %p449
    %p452 = pneg %p451
    %s453 = sadd.s32 %s448, 2
    %s454 = scalar_select %p452, %s453, %s448
    %s455 = smul.u32 %s454, 8
    %s456 = scalar_lea.vmem [#allocation2], %s455
    %v457 = vld [vmem:[%s456] sm:$0xff]
    %s458 = sadd.s32 %s303, 1
    %p459 = scmp.lt.s32.totalorder %s458, 0
    %s460 = ssub.s32 0, %s458
    %s461 = scalar_select %p459, %s460, %s458
    %s462 = sand.u32 %s461, 1
    %s463 = ssub.s32 0, %s462
    %s464 = scalar_select %p459, %s463, %s462
    %p465 = scmp.ne.s32.totalorder %s464, 0
    %p466 = scmp.lt.s32.totalorder %s464, 0
    %p467 = pnand %p466, %p465
    %p468 = pneg %p467
    %s469 = sadd.s32 %s464, 2
    %s470 = scalar_select %p468, %s469, %s464
    %s471 = smul.u32 %s470, 8
    %s472 = scalar_lea.vmem [#allocation2], %s471
    %v473 = vld [vmem:[%s472] sm:$0xff]
    %v474 = vmul.f32 %v413, %v457
    %v475 = vmul.f32 %v439, %v473
    %v476 = vsel %vm242, %v474, -inf
    %477 = vmax.xlane.f32.xlu0 %v476
    %v478 = vpop.xlane.xlu0 %477
    %v479 = vsel %vm242, %v475, -inf
    %480 = vmax.xlane.f32.xlu0 %v479
    %v481 = vpop.xlane.xlu0 %480
    %v482 = vsub.f32 %v474, %v478
    %v483 = vsub.f32 %v475, %v481
    %v484 = vmul.f32 %v482, 1.442695
    %v485 = vpow.pop %v484
    %v486 = vmul.f32 %v483, 1.442695
    %v487 = vpow.pop %v486
    %v488 = vsel %vm242, %v485, 0.0
    %489 = vadd.xlane.f32.xlu0 %v488
    %v490 = vpop.xlane.xlu0 %489
    %v491 = vsel %vm242, %v487, 0.0
    %492 = vadd.xlane.f32.xlu0 %v491
    %v493 = vpop.xlane.xlu0 %492
    %v494 = vrcp.pop %v490
    %v495 = vrcp.pop %v493
    %v496 = vmul.f32 %v485, %v494
    %v497 = vmul.f32 %v487, %v495
    %v498 = vadd.f32 %v343, %v496
    %v499 = vadd.f32 %v344, %v497
    %v500 = vpack.c.bf16 %v496, %v496
    %v501 = vpack.c.bf16 %v497, %v497
    %502 = vrot.lane.b32.xlu0 %v239, 56
    %v503 = vpop.permute.xlu0 %502
    %v505 = vsel %vm242, %v500, 0
    %v508 = vsel %vm352, %v503, 0
    %510 = vmatpush.bf16.msra.mxu0 0
    %511 = vmatpush.bf16.msra.mxu0 0
    %512 = vmatpush.bf16.msra.mxu0 0
    %513 = vmatpush.bf16.msra.mxu0 0
    %514 = vmatpush.bf16.msra.mxu0 0
    %515 = vmatpush.bf16.msra.mxu0 0
    %516 = vmatpush.bf16.msra.mxu0 0
    %517 = vmatpush.bf16.msra.mxu0 %v508
    %518 = vmatmul.bf16.gmra.mxu0 %v505
    %v519 = vpop.f32.mrf.mxu0
    %v520 = vadd.f32 0.0, %v519
    %v521 = vpop.f32.mrf.mxu0
    %522 = vdwg.mxu0
    %523 = vrot.lane.b32.xlu0 %v264, 56
    %v524 = vpop.permute.xlu0 %523
    %v526 = vsel %vm242, %v501, 0
    %v529 = vsel %vm352, %v524, 0
    %531 = vmatpush.bf16.msra.mxu0 0
    %532 = vmatpush.bf16.msra.mxu0 0
    %533 = vmatpush.bf16.msra.mxu0 0
    %534 = vmatpush.bf16.msra.mxu0 0
    %535 = vmatpush.bf16.msra.mxu0 0
    %536 = vmatpush.bf16.msra.mxu0 0
    %537 = vmatpush.bf16.msra.mxu0 0
    %538 = vmatpush.bf16.msra.mxu0 %v529
    %539 = vmatmul.bf16.gmra.mxu0 %v526
    %v540 = vpop.f32.mrf.mxu0
    %v541 = vadd.f32 0.0, %v540
    %v542 = vpop.f32.mrf.mxu0
    %543 = vdwg.mxu0
    %544 = vrot.lane.b32.xlu0 %v392, 112
    %v545 = vpop.permute.xlu0 %544
    %546 = vrot.lane.b32.xlu0 %v239, 80
    %v547 = vpop.permute.xlu0 %546
    %v549 = vsel %vm242, %v545, 0
    %v552 = vsel %vm242, %v547, 0
    %554 = vmatpush.bf16.xpose.msra.mxu0 0
    %555 = vmatpush.bf16.xpose.msra.mxu0 0
    %556 = vmatpush.bf16.xpose.msra.mxu0 0
    %557 = vmatpush.bf16.xpose.msra.mxu0 0
    %558 = vmatpush.bf16.xpose.msra.mxu0 0
    %559 = vmatpush.bf16.xpose.msra.mxu0 0
    %560 = vmatpush.bf16.xpose.msra.mxu0 0
    %561 = vmatpush.bf16.xpose.msra.mxu0 %v552
    %562 = vmatmul.bf16.gmra.mxu0 %v549
    %v563 = vpop.f32.mrf.mxu0
    %v564 = vadd.f32 0.0, %v563
    %v565 = vpop.f32.mrf.mxu0
    %566 = vdwg.mxu0
    %567 = vrot.lane.b32.xlu0 %v418, 112
    %v568 = vpop.permute.xlu0 %567
    %569 = vrot.lane.b32.xlu0 %v264, 80
    %v570 = vpop.permute.xlu0 %569
    %v572 = vsel %vm242, %v568, 0
    %v575 = vsel %vm242, %v570, 0
    %577 = vmatpush.bf16.xpose.msra.mxu0 0
    %578 = vmatpush.bf16.xpose.msra.mxu0 0
    %579 = vmatpush.bf16.xpose.msra.mxu0 0
    %580 = vmatpush.bf16.xpose.msra.mxu0 0
    %581 = vmatpush.bf16.xpose.msra.mxu0 0
    %582 = vmatpush.bf16.xpose.msra.mxu0 0
    %583 = vmatpush.bf16.xpose.msra.mxu0 0
    %584 = vmatpush.bf16.xpose.msra.mxu0 %v575
    %585 = vmatmul.bf16.gmra.mxu0 %v572
    %v586 = vpop.f32.mrf.mxu0
    %v587 = vadd.f32 0.0, %v586
    %v588 = vpop.f32.mrf.mxu0
    %589 = vdwg.mxu0
    %s590 = sadd.s32 %s286, 2
    %p591 = scmp.lt.s32.totalorder %s590, 0
    %s592 = ssub.s32 0, %s590
    %s593 = scalar_select %p591, %s592, %s590
    %s594 = sand.u32 %s593, 1
    %s595 = ssub.s32 0, %s594
    %s596 = scalar_select %p591, %s595, %s594
    %p597 = scmp.ne.s32.totalorder %s596, 0
    %p598 = scmp.lt.s32.totalorder %s596, 0
    %p599 = pnand %p598, %p597
    %p600 = pneg %p599
    %s601 = sadd.s32 %s596, 2
    %s602 = scalar_select %p600, %s601, %s596
    %s603 = smul.u32 %s602, 8
    %s604 = scalar_lea.vmem [#allocation2], %s603
    %v605 = vld [vmem:[%s604] sm:$0xff]
    %s606 = sadd.s32 %s303, 2
    %p607 = scmp.lt.s32.totalorder %s606, 0
    %s608 = ssub.s32 0, %s606
    %s609 = scalar_select %p607, %s608, %s606
    %s610 = sand.u32 %s609, 1
    %s611 = ssub.s32 0, %s610
    %s612 = scalar_select %p607, %s611, %s610
    %p613 = scmp.ne.s32.totalorder %s612, 0
    %p614 = scmp.lt.s32.totalorder %s612, 0
    %p615 = pnand %p614, %p613
    %p616 = pneg %p615
    %s617 = sadd.s32 %s612, 2
    %s618 = scalar_select %p616, %s617, %s612
    %s619 = smul.u32 %s618, 8
    %s620 = scalar_lea.vmem [#allocation2], %s619
    %v621 = vld [vmem:[%s620] sm:$0xff]
    %v622 = vmul.f32 %v564, %v605
    %v623 = vmul.f32 %v587, %v621
    %v624 = vsel %vm242, %v622, -inf
    %625 = vmax.xlane.f32.xlu0 %v624
    %v626 = vpop.xlane.xlu0 %625
    %v627 = vsel %vm242, %v623, -inf
    %628 = vmax.xlane.f32.xlu0 %v627
    %v629 = vpop.xlane.xlu0 %628
    %v630 = vsub.f32 %v622, %v626
    %v631 = vsub.f32 %v623, %v629
    %v632 = vmul.f32 %v630, 1.442695
    %v633 = vpow.pop %v632
    %v634 = vmul.f32 %v631, 1.442695
    %v635 = vpow.pop %v634
    %v636 = vsel %vm242, %v633, 0.0
    %637 = vadd.xlane.f32.xlu0 %v636
    %v638 = vpop.xlane.xlu0 %637
    %v639 = vsel %vm242, %v635, 0.0
    %640 = vadd.xlane.f32.xlu0 %v639
    %v641 = vpop.xlane.xlu0 %640
    %v642 = vrcp.pop %v638
    %v643 = vrcp.pop %v641
    %v644 = vmul.f32 %v633, %v642
    %v645 = vmul.f32 %v635, %v643
    %v646 = vadd.f32 %v498, %v644
    %v647 = vadd.f32 %v499, %v645
    %v648 = vpack.c.bf16 %v644, %v644
    %v649 = vpack.c.bf16 %v645, %v645
    %650 = vrot.lane.b32.xlu0 %v239, 48
    %v651 = vpop.permute.xlu0 %650
    %v653 = vsel %vm242, %v648, 0
    %v656 = vsel %vm352, %v651, 0
    %658 = vmatpush.bf16.msra.mxu0 0
    %659 = vmatpush.bf16.msra.mxu0 0
    %660 = vmatpush.bf16.msra.mxu0 0
    %661 = vmatpush.bf16.msra.mxu0 0
    %662 = vmatpush.bf16.msra.mxu0 0
    %663 = vmatpush.bf16.msra.mxu0 0
    %664 = vmatpush.bf16.msra.mxu0 0
    %665 = vmatpush.bf16.msra.mxu0 %v656
    %666 = vmatmul.bf16.gmra.mxu0 %v653
    %v667 = vpop.f32.mrf.mxu0
    %v668 = vadd.f32 0.0, %v667
    %v669 = vpop.f32.mrf.mxu0
    %670 = vdwg.mxu0
    %671 = vrot.lane.b32.xlu0 %v264, 48
    %v672 = vpop.permute.xlu0 %671
    %v674 = vsel %vm242, %v649, 0
    %v677 = vsel %vm352, %v672, 0
    %679 = vmatpush.bf16.msra.mxu0 0
    %680 = vmatpush.bf16.msra.mxu0 0
    %681 = vmatpush.bf16.msra.mxu0 0
    %682 = vmatpush.bf16.msra.mxu0 0
    %683 = vmatpush.bf16.msra.mxu0 0
    %684 = vmatpush.bf16.msra.mxu0 0
    %685 = vmatpush.bf16.msra.mxu0 0
    %686 = vmatpush.bf16.msra.mxu0 %v677
    %687 = vmatmul.bf16.gmra.mxu0 %v674
    %v688 = vpop.f32.mrf.mxu0
    %v689 = vadd.f32 0.0, %v688
    %v690 = vpop.f32.mrf.mxu0
    %691 = vdwg.mxu0
    %692 = vrot.lane.b32.xlu0 %v392, 104
    %v693 = vpop.permute.xlu0 %692
    %694 = vrot.lane.b32.xlu0 %v239, 72
    %v695 = vpop.permute.xlu0 %694
    %v697 = vsel %vm242, %v693, 0
    %v700 = vsel %vm242, %v695, 0
    %702 = vmatpush.bf16.xpose.msra.mxu0 0
    %703 = vmatpush.bf16.xpose.msra.mxu0 0
    %704 = vmatpush.bf16.xpose.msra.mxu0 0
    %705 = vmatpush.bf16.xpose.msra.mxu0 0
    %706 = vmatpush.bf16.xpose.msra.mxu0 0
    %707 = vmatpush.bf16.xpose.msra.mxu0 0
    %708 = vmatpush.bf16.xpose.msra.mxu0 0
    %709 = vmatpush.bf16.xpose.msra.mxu0 %v700
    %710 = vmatmul.bf16.gmra.mxu0 %v697
    %v711 = vpop.f32.mrf.mxu0
    %v712 = vadd.f32 0.0, %v711
    %v713 = vpop.f32.mrf.mxu0
    %714 = vdwg.mxu0
    %715 = vrot.lane.b32.xlu0 %v418, 104
    %v716 = vpop.permute.xlu0 %715
    %717 = vrot.lane.b32.xlu0 %v264, 72
    %v718 = vpop.permute.xlu0 %717
    %v720 = vsel %vm242, %v716, 0
    %v723 = vsel %vm242, %v718, 0
    %725 = vmatpush.bf16.xpose.msra.mxu0 0
    %726 = vmatpush.bf16.xpose.msra.mxu0 0
    %727 = vmatpush.bf16.xpose.msra.mxu0 0
    %728 = vmatpush.bf16.xpose.msra.mxu0 0
    %729 = vmatpush.bf16.xpose.msra.mxu0 0
    %730 = vmatpush.bf16.xpose.msra.mxu0 0
    %731 = vmatpush.bf16.xpose.msra.mxu0 0
    %732 = vmatpush.bf16.xpose.msra.mxu0 %v723
    %733 = vmatmul.bf16.gmra.mxu0 %v720
    %v734 = vpop.f32.mrf.mxu0
    %v735 = vadd.f32 0.0, %v734
    %v736 = vpop.f32.mrf.mxu0
    %737 = vdwg.mxu0
    %s738 = sadd.s32 %s286, 3
    %p739 = scmp.lt.s32.totalorder %s738, 0
    %s740 = ssub.s32 0, %s738
    %s741 = scalar_select %p739, %s740, %s738
    %s742 = sand.u32 %s741, 1
    %s743 = ssub.s32 0, %s742
    %s744 = scalar_select %p739, %s743, %s742
    %p745 = scmp.ne.s32.totalorder %s744, 0
    %p746 = scmp.lt.s32.totalorder %s744, 0
    %p747 = pnand %p746, %p745
    %p748 = pneg %p747
    %s749 = sadd.s32 %s744, 2
    %s750 = scalar_select %p748, %s749, %s744
    %s751 = smul.u32 %s750, 8
    %s752 = scalar_lea.vmem [#allocation2], %s751
    %v753 = vld [vmem:[%s752] sm:$0xff]
    %s754 = sadd.s32 %s303, 3
    %p755 = scmp.lt.s32.totalorder %s754, 0
    %s756 = ssub.s32 0, %s754
    %s757 = scalar_select %p755, %s756, %s754
    %s758 = sand.u32 %s757, 1
    %s759 = ssub.s32 0, %s758
    %s760 = scalar_select %p755, %s759, %s758
    %p761 = scmp.ne.s32.totalorder %s760, 0
    %p762 = scmp.lt.s32.totalorder %s760, 0
    %p763 = pnand %p762, %p761
    %p764 = pneg %p763
    %s765 = sadd.s32 %s760, 2
    %s766 = scalar_select %p764, %s765, %s760
    %s767 = smul.u32 %s766, 8
    %s768 = scalar_lea.vmem [#allocation2], %s767
    %v769 = vld [vmem:[%s768] sm:$0xff]
    %v770 = vmul.f32 %v712, %v753
    %v771 = vmul.f32 %v735, %v769
    %v772 = vsel %vm242, %v770, -inf
    %773 = vmax.xlane.f32.xlu0 %v772
    %v774 = vpop.xlane.xlu0 %773
    %v775 = vsel %vm242, %v771, -inf
    %776 = vmax.xlane.f32.xlu0 %v775
    %v777 = vpop.xlane.xlu0 %776
    %v778 = vsub.f32 %v770, %v774
    %v779 = vsub.f32 %v771, %v777
    %v780 = vmul.f32 %v778, 1.442695
    %v781 = vpow.pop %v780
    %v782 = vmul.f32 %v779, 1.442695
    %v783 = vpow.pop %v782
    %v784 = vsel %vm242, %v781, 0.0
    %785 = vadd.xlane.f32.xlu0 %v784
    %v786 = vpop.xlane.xlu0 %785
    %v787 = vsel %vm242, %v783, 0.0
    %788 = vadd.xlane.f32.xlu0 %v787
    %v789 = vpop.xlane.xlu0 %788
    %v790 = vrcp.pop %v786
    %v791 = vrcp.pop %v789
    %v792 = vmul.f32 %v781, %v790
    %v793 = vmul.f32 %v783, %v791
    %v794 = vadd.f32 %v646, %v792
    %v795 = vadd.f32 %v647, %v793
    %v796 = vpack.c.bf16 %v792, %v792
    %v797 = vpack.c.bf16 %v793, %v793
    %798 = vrot.lane.b32.xlu0 %v239, 40
    %v799 = vpop.permute.xlu0 %798
    %v801 = vsel %vm242, %v796, 0
    %v804 = vsel %vm352, %v799, 0
    %806 = vmatpush.bf16.msra.mxu0 0
    %807 = vmatpush.bf16.msra.mxu0 0
    %808 = vmatpush.bf16.msra.mxu0 0
    %809 = vmatpush.bf16.msra.mxu0 0
    %810 = vmatpush.bf16.msra.mxu0 0
    %811 = vmatpush.bf16.msra.mxu0 0
    %812 = vmatpush.bf16.msra.mxu0 0
    %813 = vmatpush.bf16.msra.mxu0 %v804
    %814 = vmatmul.bf16.gmra.mxu0 %v801
    %v815 = vpop.f32.mrf.mxu0
    %v816 = vadd.f32 0.0, %v815
    %v817 = vpop.f32.mrf.mxu0
    %818 = vdwg.mxu0
    %819 = vrot.lane.b32.xlu0 %v264, 40
    %v820 = vpop.permute.xlu0 %819
    %v822 = vsel %vm242, %v797, 0
    %v825 = vsel %vm352, %v820, 0
    %827 = vmatpush.bf16.msra.mxu0 0
    %828 = vmatpush.bf16.msra.mxu0 0
    %829 = vmatpush.bf16.msra.mxu0 0
    %830 = vmatpush.bf16.msra.mxu0 0
    %831 = vmatpush.bf16.msra.mxu0 0
    %832 = vmatpush.bf16.msra.mxu0 0
    %833 = vmatpush.bf16.msra.mxu0 0
    %834 = vmatpush.bf16.msra.mxu0 %v825
    %835 = vmatmul.bf16.gmra.mxu0 %v822
    %v836 = vpop.f32.mrf.mxu0
    %v837 = vadd.f32 0.0, %v836
    %v838 = vpop.f32.mrf.mxu0
    %839 = vdwg.mxu0
    %842 = vrot.lane.b32.xlu0 %v520, 8
    %v843 = vpop.permute.xlu0 %842
    %844 = vrot.lane.b32.xlu0 %v541, 8
    %v845 = vpop.permute.xlu0 %844
    %850 = vrot.lane.b32.xlu0 %v668, 16
    %v851 = vpop.permute.xlu0 %850
    %852 = vrot.lane.b32.xlu0 %v689, 16
    %v853 = vpop.permute.xlu0 %852
    %858 = vrot.lane.b32.xlu0 %v816, 24
    %v859 = vpop.permute.xlu0 %858
    %860 = vrot.lane.b32.xlu0 %v837, 24
    %v861 = vpop.permute.xlu0 %860
    %v864 = vsel %vm242, %v366, %v843
    %v865 = vsel %vm242, %v387, %v845
    %vm866 = vcmask 130048
    %v867 = vsel %vm866, %v864, %v851
    %v868 = vsel %vm866, %v865, %v853
    %vm869 = vcmask 195584
    %v870 = vsel %vm869, %v867, %v859
    %v871 = vsel %vm869, %v868, %v861
    %v872 = vpack.c.bf16 %v871, %v870
    %v873 = vld [vmem:[%s4] sm:$0xf]
    %v874 = vld [vmem:[%s4 + $0x4] sm:$0xf]
    %v875 = vld [vmem:[%s4 + $0x8] sm:$0xf]
    %v876 = vld [vmem:[%s4 + $0xc] sm:$0xf]
    %v877 = vld [vmem:[%s5] sm:$0x1]
    %v879 = vperm.slane %v877, 0
    %v885 = vunpack.c.l.b16 %v873
    %v886 = vunpack.c.l.b16 %v874
    %v887 = vunpack.c.l.b16 %v875
    %v888 = vunpack.c.l.b16 %v876
    %v889 = vpack.c.b16 %v886, %v885
    %v890 = vpack.c.b16 %v888, %v887
    %v894 = vsel %vm213, %v872, 0
    %896 = vmatpush.bf16.msra.mxu0 0
    %897 = vmatpush.bf16.msra.mxu0 0
    %898 = vmatpush.bf16.msra.mxu0 0
    %899 = vmatpush.bf16.msra.mxu0 0
    %900 = vmatpush.bf16.msra.mxu0 0
    %901 = vmatpush.bf16.msra.mxu0 0
    %902 = vmatpush.bf16.msra.mxu0 %v890
    %903 = vmatpush.bf16.msra.mxu0 %v889
    %904 = vmatmul.bf16.gmra.mxu0 %v894
    %v905 = vpop.f32.mrf.mxu0
    %v906 = vadd.f32 %v879, %v905
    %v907 = vpop.f32.mrf.mxu0
    %v908 = vadd.f32 %v879, %v907
    %909 = vdwg.mxu0
    %910 = vst.msk [vmem:[%s6] sm:$0xff] %vm213, %v906
    %911 = vst.msk [vmem:[%s6 + $0x8] sm:$0xff] %vm213, %v908
    %v912 = vmul.f32 %v794, 0.25
    %v913 = vmul.f32 %v795, 0.25
    %914 = vst.msk [vmem:[#allocation3] sm:$0xff] %vm242, %v912
    %915 = vst.msk [vmem:[#allocation3 + $0x8] sm:$0xff] %vm242, %v913
    // Predicated region
    $region30: #{multihead_attention_custom_attn.1} parent=1 // pred_check
      _
    $region31: #{multihead_attention_custom_attn.1} parent=1 // pred_check_branch
      %917 = sbr.rel (0) target = $region33
    $region32: #{multihead_attention_custom_attn.1} parent=1 // pred_region
      _
    $region33: #{multihead_attention_custom_attn.1} parent=1 // pred_fallthru
      _
    // Predicated region
    $region34: #{multihead_attention_custom_attn.1} parent=1 // pred_check
      _
    $region35: #{multihead_attention_custom_attn.1} parent=1 // pred_check_branch
      %919 = sbr.rel (0) target = $region37
    $region36: #{multihead_attention_custom_attn.1} parent=1 // pred_region
      %921 = vsyncadd [#allocation4], 0
      %s922 = sshll.u32 [#allocation3], 4
      %s923 = int_to_ptr.vmem [resolvable:$true] %s922
      %s924 = sshll.u32 %s7, 4
      %s925 = int_to_ptr.hbm [resolvable:$true] %s924
      %930 = dma.vmem_to_hbm [thread:$0]  %s923, 256, %s925, [#allocation4], 128, 128, 8
    $region37: #{multihead_attention_custom_attn.1} parent=1 // pred_fallthru
      _
    // Predicated region
    $region38: #{multihead_attention_custom_attn.1} parent=1 // pred_check
      _
    $region39: #{multihead_attention_custom_attn.1} parent=1 // pred_check_branch
      %932 = sbr.rel (0) target = $region41
    $region40: #{multihead_attention_custom_attn.1} parent=1 // pred_region
      _
    $region41: #{multihead_attention_custom_attn.1} parent=1 // pred_fallthru
      _
    // Predicated region
    $region42: #{multihead_attention_custom_attn.1} parent=1 // pred_check
      _
    $region43: #{multihead_attention_custom_attn.1} parent=1 // pred_check_branch
      %934 = sbr.rel (0) target = $region45
    $region44: #{multihead_attention_custom_attn.1} parent=1 // pred_region
      %936 = dma.done [#allocation4], 256
    $region45: #{multihead_attention_custom_attn.1} parent=1 // pred_fallthru
      _
    %937 = vsyncpa [#allocation4], 1

</llo_original>
